<compile_context>
chip_gen: v7x
topology: tpu7x:2x2x1
jax: 0.10.0
libtpu: 0.0.40
codegen_flags: <defaults>
</compile_context>

<pallas_src>
import jax
import jax.numpy as jnp
from jax import lax
from jax.experimental import pallas as pl
from jax.experimental.pallas import tpu as pltpu

LANE = 128      # TPU lane width (last dim)
SUBLANE = 8     # TPU sublane width (second-to-last dim, f32)
C_PAD = LANE    # lane-dense coordinate slab; x,y,z live in lanes 0..2


def _round_up(x, m):
    return (x + m - 1) // m * m


# ----------------------------------------------------------------------------
# Kernel
# ----------------------------------------------------------------------------
def _node_operation_kernel(
    # node-side resident inputs
    node_feats_ref,    # [N_pad, H_pad] f32
    coords_ref,        # [N_pad, C_PAD] f32
    # edge-tiled inputs
    m_ji_ref,          # [E_TILE, H_pad] f32
    recv_col_ref,      # [E_TILE, 1] int32 (-1 on padded edges)
    send_col_ref,      # [E_TILE, 1] int32
    recv_row_ref,      # [1, E_TILE] int32
    # fused attention / phi_x edge MLP
    w_e1_ref, b_e1_ref,    # [H_pad, 2*H_pad], [1, 2*H_pad]
    w_e2_ref, b_e2_ref,    # [2*H_pad, 2] block-diagonal, [1, 2]
    # phi_n node MLP (concat weight split into its two halves)
    wn1x_ref, wn1m_ref, bn1_ref, wn2_ref, bn2_ref,
    # outputs
    node_out_ref,      # [N_pad, H_pad]
    coords_out_ref,    # [N_pad, C_PAD]
    att_out_ref,       # [E_TILE, 1]
    # scratch accumulators (persist across the edge grid)
    m_i_ref,           # [N_pad, H_pad] f32
    delta_ref,         # [N_pad, C_PAD] f32
):
    f32 = jnp.float32
    bf16 = jnp.bfloat16
    step = pl.program_id(0)
    last = pl.num_programs(0) - 1

    n_pad = node_feats_ref.shape[0]
    e_tile = m_ji_ref.shape[0]

    @pl.when(step == 0)
    def _init():
        m_i_ref[...] = jnp.zeros_like(m_i_ref)
        delta_ref[...] = jnp.zeros_like(delta_ref)

    # ---- fused edge MLPs: attention(m_ji) and phi_x(m_ji) in one pass -------
    m_tile = m_ji_ref[...]                                            # [E, Hp]
    h_e = jnp.dot(m_tile, w_e1_ref[...], preferred_element_type=f32) + b_e1_ref[...]
    h_e = h_e * jax.nn.sigmoid(h_e)                                   # SiLU (EUP)
    out2 = jnp.dot(h_e, w_e2_ref[...], preferred_element_type=f32) + b_e2_ref[...]
    attention = jax.nn.sigmoid(out2[:, 0:1])                          # [E, 1]
    phi_x = out2[:, 1:2]                                              # [E, 1]
    att_out_ref[...] = attention

    # ---- scatter-add m_i += onehot_recv[N,E] @ (m_ji * att)[E,H] ------------
    # Row-major [N,E]@[E,H] orientation (no axis-0 contraction); one-hot exact
    # in bf16, data operand downcast to bf16, accumulation in f32.
    recv_row = recv_row_ref[...]                                      # [1, E]
    iota_ne = lax.broadcasted_iota(jnp.int32, (n_pad, e_tile), 0)
    onehot_recv_ne = (iota_ne == recv_row).astype(bf16)               # [N, E]
    weighted = (m_tile * attention).astype(bf16)                      # [E, Hp]
    m_i_ref[...] += jnp.dot(onehot_recv_ne, weighted,
                            preferred_element_type=f32)

    # ---- coordinate update: r_ji gather, phi_x scaling, scatter-add ---------
    iota_en = lax.broadcasted_iota(jnp.int32, (e_tile, n_pad), 1)
    send_col = send_col_ref[...]                                      # [E, 1]
    recv_col = recv_col_ref[...]
    diff_en = ((send_col == iota_en).astype(f32)
               - (recv_col == iota_en).astype(f32)).astype(bf16)      # [E, N]
    r_ji = jnp.dot(diff_en, coords_ref[...].astype(bf16),
                   preferred_element_type=f32)                        # [E, C_PAD]
    abs_r = jnp.sqrt(jnp.sum(r_ji * r_ji, axis=-1, keepdims=True))    # [E, 1]
    delta_ji = (r_ji * (phi_x / (abs_r + 1.0))).astype(bf16)          # [E, C_PAD]
    delta_ref[...] += jnp.dot(onehot_recv_ne, delta_ji,
                              preferred_element_type=f32)

    # ---- node-side phi_n + residual: hoisted to the final edge step ---------
    @pl.when(step == last)
    def _finalize():
        x = node_feats_ref[...]
        hn = (jnp.dot(x, wn1x_ref[...], preferred_element_type=f32)
              + jnp.dot(m_i_ref[...], wn1m_ref[...], preferred_element_type=f32)
              + bn1_ref[...])
        hn = hn * jax.nn.sigmoid(hn)                                  # SiLU
        phi_n = jnp.dot(hn, wn2_ref[...], preferred_element_type=f32) + bn2_ref[...]
        node_out_ref[...] = phi_n + x
        coords_out_ref[...] = coords_ref[...] + delta_ref[...]


# ----------------------------------------------------------------------------
# Wrapper
# ----------------------------------------------------------------------------
def _choose_edge_tile(n_pad, h_pad, budget_bytes=12 * 2**20):
    """Largest 128-multiple edge tile whose per-step footprint (double-buffered
    DMA blocks + in-kernel temporaries) fits a conservative v7x-safe budget."""
    per_edge = 2 * h_pad * 4                       # m_ji tile, double buffered (f32)
    per_edge += 2 * 4 * 4                          # recv/send/att blocks
    per_edge += 3 * n_pad * 2                      # per-tile one-hot slices (bf16)
    per_edge += (2 * h_pad + h_pad + C_PAD) * 4    # h_e / weighted / r_ji temporaries
    tile = budget_bytes // max(per_edge, 1)
    return int(max(LANE, min(4096, (tile // LANE) * LANE)))


def _vmem_limit_bytes(n_pad, h_pad, e_tile):
    f32b = 4
    edge_blocks = (e_tile * h_pad + 4 * e_tile) * f32b
    resident_in = (n_pad * h_pad + n_pad * C_PAD) * f32b
    weights = (2 * h_pad * h_pad + 2 * h_pad
               + 2 * h_pad * 2 + 2
               + 3 * h_pad * h_pad + 2 * h_pad) * f32b
    outputs = (n_pad * h_pad + n_pad * C_PAD) * f32b
    scratch = (n_pad * h_pad + n_pad * C_PAD) * f32b
    total = 2 * (edge_blocks + resident_in + weights + outputs) + scratch
    total += 8 * 2**20                             # temporaries + headroom
    return int(min(max(total, 32 * 2**20), 48 * 2**20))


def _cost_estimate(n_pad, h_pad, e_pad):
    flops = (
        2 * e_pad * h_pad * (2 * h_pad)        # fused edge MLP layer 1
        + 2 * e_pad * (2 * h_pad) * 2          # fused edge MLP layer 2
        + 2 * e_pad * n_pad * h_pad            # m_i scatter matmul
        + 2 * e_pad * n_pad * C_PAD * 2        # r_ji gather + delta scatter
        + 2 * n_pad * h_pad * h_pad * 3        # phi_n
    )
    transcendentals = e_pad * (2 * h_pad + 2) + n_pad * h_pad + e_pad
    bytes_accessed = 4 * (
        e_pad * (h_pad + 4)
        + 2 * n_pad * (h_pad + C_PAD)
        + 2 * h_pad * h_pad + 2 * h_pad
        + 2 * h_pad * 2 + 2
        + 3 * h_pad * h_pad + 2 * h_pad
    )
    return pl.CostEstimate(flops=int(flops),
                           transcendentals=int(transcendentals),
                           bytes_accessed=int(bytes_accessed))


def _node_operation_impl(node_feats, coords, m_ji, edge_indices, params, e_tile=None):
    f32 = jnp.float32
    N, H = node_feats.shape
    E = m_ji.shape[0]
    (wa1, ba1, wa2, ba2, wn1, bn1, wn2, bn2, wx1, bx1, wx2, bx2) = params

    H_pad = _round_up(H, LANE)
    N_pad = _round_up(N, SUBLANE)
    if e_tile is None:
        e_tile = _choose_edge_tile(N_pad, H_pad)
    e_tile = _round_up(int(e_tile), LANE)
    E_pad = _round_up(max(E, 1), e_tile)
    n_steps = E_pad // e_tile

    # ---- zero-padded, lane-dense operands -----------------------------------
    def pad2(w, r, c):
        w = w.astype(f32)
        return jnp.zeros((r, c), f32).at[:w.shape[0], :w.shape[1]].set(w)

    nf = pad2(node_feats, N_pad, H_pad)
    cp = pad2(coords, N_pad, C_PAD)
    mj = pad2(m_ji, E_pad, H_pad)
    recv = jnp.full((E_pad,), -1, jnp.int32).at[:E].set(edge_indices[0].astype(jnp.int32))
    send = jnp.full((E_pad,), -1, jnp.int32).at[:E].set(edge_indices[1].astype(jnp.int32))
    recv_col = recv.reshape(E_pad, 1)
    send_col = send.reshape(E_pad, 1)
    recv_row = recv.reshape(1, E_pad)

    # fused attention/phi_x first layer: one [H_pad, 2*H_pad] weight
    w_e1 = jnp.concatenate([pad2(wa1, H_pad, H_pad), pad2(wx1, H_pad, H_pad)], axis=1)
    b_e1 = jnp.concatenate([pad2(ba1, 1, H_pad), pad2(bx1, 1, H_pad)], axis=1)
    # fused block-diagonal second layer: col 0 = attention logit, col 1 = phi_x
    w_e2 = jnp.zeros((2 * H_pad, 2), f32)
    w_e2 = w_e2.at[:H, 0].set(wa2[:, 0].astype(f32))
    w_e2 = w_e2.at[H_pad:H_pad + H, 1].set(wx2[:, 0].astype(f32))
    b_e2 = jnp.concatenate([ba2.astype(f32), bx2.astype(f32)], axis=1)

    # phi_n: split the concat([x, m_i]) weight into its two halves
    wn1x = pad2(wn1[:H], H_pad, H_pad)
    wn1m = pad2(wn1[H:], H_pad, H_pad)
    bn1_p = pad2(bn1, 1, H_pad)
    wn2_p = pad2(wn2, H_pad, H_pad)
    bn2_p = pad2(bn2, 1, H_pad)

    resident = lambda shape: pl.BlockSpec(shape, lambda e: (0, 0))
    in_specs = [
        resident((N_pad, H_pad)),                          # node_feats
        resident((N_pad, C_PAD)),                          # coordinates
        pl.BlockSpec((e_tile, H_pad), lambda e: (e, 0)),   # m_ji tile
        pl.BlockSpec((e_tile, 1), lambda e: (e, 0)),       # receiver (column)
        pl.BlockSpec((e_tile, 1), lambda e: (e, 0)),       # sender (column)
        pl.BlockSpec((1, e_tile), lambda e: (0, e)),       # receiver (row)
        resident((H_pad, 2 * H_pad)), resident((1, 2 * H_pad)),
        resident((2 * H_pad, 2)), resident((1, 2)),
        resident((H_pad, H_pad)), resident((H_pad, H_pad)), resident((1, H_pad)),
        resident((H_pad, H_pad)), resident((1, H_pad)),
    ]
    out_specs = (
        pl.BlockSpec((N_pad, H_pad), lambda e: (0, 0)),    # node_feats out (resident)
        pl.BlockSpec((N_pad, C_PAD), lambda e: (0, 0)),    # coordinates out (resident)
        pl.BlockSpec((e_tile, 1), lambda e: (e, 0)),       # attention_ji per tile
    )
    out_shapes = (
        jax.ShapeDtypeStruct((N_pad, H_pad), f32),
        jax.ShapeDtypeStruct((N_pad, C_PAD), f32),
        jax.ShapeDtypeStruct((E_pad, 1), f32),
    )

    grid_spec = pltpu.PrefetchScalarGridSpec(
        num_scalar_prefetch=0,
        grid=(n_steps,),
        in_specs=in_specs,
        out_specs=out_specs,
        scratch_shapes=[pltpu.VMEM((N_pad, H_pad), f32),   # m_i accumulator
                        pltpu.VMEM((N_pad, C_PAD), f32)],  # delta accumulator
    )

    node_out_p, coords_out_p, att_p = pl.pallas_call(
        _node_operation_kernel,
        out_shape=out_shapes,
        grid_spec=grid_spec,
        compiler_params=pltpu.CompilerParams(
            dimension_semantics=("arbitrary",),            # reduction over edge tiles
            vmem_limit_bytes=_vmem_limit_bytes(N_pad, H_pad, e_tile),
        ),
        cost_estimate=_cost_estimate(N_pad, H_pad, E_pad),
    )(nf, cp, mj, recv_col, send_col, recv_row,
      w_e1, b_e1, w_e2, b_e2, wn1x, wn1m, bn1_p, wn2_p, bn2_p)

    return (node_out_p[:N, :H], coords_out_p[:N, :3], att_p[:E, :])


node_operation = jax.jit(_node_operation_impl, static_argnames=("e_tile",))


# ----------------------------------------------------------------------------
# Synthetic parameters + pure-JAX reference (mirrors the PyTorch forward)
# ----------------------------------------------------------------------------
def make_params(key, c_hidden):
    H = c_hidden
    layers = [(H, H), (H, 1),        # attention: Linear(H,H), Linear(H,1)
              (2 * H, H), (H, H),    # phi_n:     Linear(2H,H), Linear(H,H)
              (H, H), (H, 1)]        # phi_x:     Linear(H,H), Linear(H,1)
    keys = jax.random.split(key, 2 * len(layers))
    params = []
    for i, (cin, cout) in enumerate(layers):
        s = 1.0 / jnp.sqrt(float(cin))
        params.append(jax.random.normal(keys[2 * i], (cin, cout), jnp.float32) * s)
        params.append(jax.random.normal(keys[2 * i + 1], (1, cout), jnp.float32) * s)
    return tuple(params)


def reference(node_feats, coords, m_ji, edge_indices, params):
    (wa1, ba1, wa2, ba2, wn1, bn1, wn2, bn2, wx1, bx1, wx2, bx2) = params
    N = node_feats.shape[0]
    receiver = edge_indices[0]
    sender = edge_indices[1]
    silu = jax.nn.silu

    att = jax.nn.sigmoid(silu(m_ji @ wa1 + ba1) @ wa2 + ba2)
    m_i = jnp.zeros((N, m_ji.shape[1]), jnp.float32).at[receiver].add(m_ji * att)
    cat = jnp.concatenate([node_feats, m_i], axis=-1)
    nf = silu(cat @ wn1 + bn1) @ wn2 + bn2 + node_feats

    r_ji = coords[sender] - coords[receiver]
    abs_r = jnp.linalg.norm(r_ji, axis=-1, keepdims=True)
    px = silu(m_ji @ wx1 + bx1) @ wx2 + bx2
    delta = r_ji / (abs_r + 1.0) * px
    new_coords = coords + jnp.zeros_like(coords).at[receiver].add(delta)
    return nf, new_coords, att


if __name__ == "__main__":
    N, E, H = 16, 300, 32
    key = jax.random.PRNGKey(0)
    k_nf, k_c, k_m, k_e, k_p = jax.random.split(key, 5)

    node_feats = jax.random.normal(k_nf, (N, H), dtype=jnp.float32)
    coords = jax.random.normal(k_c, (N, 3), dtype=jnp.float32)
    m_ji = jax.random.normal(k_m, (E, H), dtype=jnp.float32)
    edge_indices = jax.random.randint(k_e, (2, E), 0, N, dtype=jnp.int32)
    params = make_params(k_p, H)

    # e_tile=128 -> E padded to 384 -> a 3-step edge grid, exercising the
    # accumulator / double-buffered pipeline path (not just one block).
    out_nf, out_coords, out_att = node_operation(
        node_feats, coords, m_ji, edge_indices, params, e_tile=128)
    jax.block_until_ready((out_nf, out_coords, out_att))

    ref_nf, ref_coords, ref_att = reference(
        node_feats, coords, m_ji, edge_indices, params)

    # attention is a pure f32 path -> tight tolerance; the m_i / delta scatter
    # matmuls use bf16 MXU operands (per the perf review) -> slightly looser.
    assert out_att.shape == (E, 1) and out_nf.shape == (N, H) and out_coords.shape == (N, 3)
    assert jnp.allclose(out_att, ref_att, rtol=1e-4, atol=1e-4)
    assert jnp.allclose(out_nf, ref_nf, rtol=2e-2, atol=2e-2)
    assert jnp.allclose(out_coords, ref_coords, rtol=5e-2, atol=5e-2)

    print("KERNEL_OK")
</pallas_src>

<mosaic_0001>
module attributes {stable_mosaic.version = 11 : i64} {
  func.func @_node_operation_kernel(%arg0: i32, %arg1: memref<16x128xf32, #tpu.memory_space<vmem>>, %arg2: memref<16x128xf32, #tpu.memory_space<vmem>>, %arg3: memref<128x128xf32, #tpu.memory_space<vmem>>, %arg4: memref<128x1xi32, #tpu.memory_space<vmem>>, %arg5: memref<128x1xi32, #tpu.memory_space<vmem>>, %arg6: memref<1x128xi32, #tpu.memory_space<vmem>>, %arg7: memref<128x256xf32, #tpu.memory_space<vmem>>, %arg8: memref<1x256xf32, #tpu.memory_space<vmem>>, %arg9: memref<256x2xf32, #tpu.memory_space<vmem>>, %arg10: memref<1x2xf32, #tpu.memory_space<vmem>>, %arg11: memref<128x128xf32, #tpu.memory_space<vmem>>, %arg12: memref<128x128xf32, #tpu.memory_space<vmem>>, %arg13: memref<1x128xf32, #tpu.memory_space<vmem>>, %arg14: memref<128x128xf32, #tpu.memory_space<vmem>>, %arg15: memref<1x128xf32, #tpu.memory_space<vmem>>, %arg16: memref<16x128xf32, #tpu.memory_space<vmem>>, %arg17: memref<16x128xf32, #tpu.memory_space<vmem>>, %arg18: memref<128x1xf32, #tpu.memory_space<vmem>>, %arg19: memref<16x128xf32, #tpu.memory_space<vmem>>, %arg20: memref<16x128xf32, #tpu.memory_space<vmem>>) attributes {dimension_semantics = [#tpu.dimension_semantics<arbitrary>], iteration_bounds = array<i64: 3>, scalar_prefetch = 0 : i64, scratch_operands = 2 : i64, tpu.core_type = #tpu.core_type<tc>, window_params = [{pipeline_mode = #tpu.pipeline_mode<synchronous>, transform_indices = @transform_0, window_bounds = array<i64: 16, 128>}, {pipeline_mode = #tpu.pipeline_mode<synchronous>, transform_indices = @transform_1, window_bounds = array<i64: 16, 128>}, {transform_indices = @transform_2, window_bounds = array<i64: 128, 128>}, {transform_indices = @transform_3, window_bounds = array<i64: 128, 1>}, {transform_indices = @transform_4, window_bounds = array<i64: 128, 1>}, {transform_indices = @transform_5, window_bounds = array<i64: 1, 128>}, {pipeline_mode = #tpu.pipeline_mode<synchronous>, transform_indices = @transform_6, window_bounds = array<i64: 128, 256>}, {pipeline_mode = #tpu.pipeline_mode<synchronous>, transform_indices = @transform_7, window_bounds = array<i64: 1, 256>}, {pipeline_mode = #tpu.pipeline_mode<synchronous>, transform_indices = @transform_8, window_bounds = array<i64: 256, 2>}, {pipeline_mode = #tpu.pipeline_mode<synchronous>, transform_indices = @transform_9, window_bounds = array<i64: 1, 2>}, {pipeline_mode = #tpu.pipeline_mode<synchronous>, transform_indices = @transform_10, window_bounds = array<i64: 128, 128>}, {pipeline_mode = #tpu.pipeline_mode<synchronous>, transform_indices = @transform_11, window_bounds = array<i64: 128, 128>}, {pipeline_mode = #tpu.pipeline_mode<synchronous>, transform_indices = @transform_12, window_bounds = array<i64: 1, 128>}, {pipeline_mode = #tpu.pipeline_mode<synchronous>, transform_indices = @transform_13, window_bounds = array<i64: 128, 128>}, {pipeline_mode = #tpu.pipeline_mode<synchronous>, transform_indices = @transform_14, window_bounds = array<i64: 1, 128>}, {pipeline_mode = #tpu.pipeline_mode<synchronous>, transform_indices = @transform_15, window_bounds = array<i64: 16, 128>}, {pipeline_mode = #tpu.pipeline_mode<synchronous>, transform_indices = @transform_16, window_bounds = array<i64: 16, 128>}, {transform_indices = @transform_17, window_bounds = array<i64: 128, 1>}]} {
    %c0_i32 = arith.constant 0 : i32
    %0 = arith.cmpi eq, %arg0, %c0_i32 : i32
    %1 = arith.extui %0 : i1 to i32
    %c0_i32_0 = arith.constant 0 : i32
    %2 = arith.cmpi ne, %1, %c0_i32_0 : i32
    scf.if %2 {
      %cst_37 = arith.constant 0.000000e+00 : f32
      %75 = vector.broadcast %cst_37 : f32 to vector<16x128xf32>
      %c0_38 = arith.constant 0 : index
      %c0_39 = arith.constant 0 : index
      %76 = vector.load %arg19[%c0_38, %c0_39] : memref<16x128xf32, #tpu.memory_space<vmem>>, vector<16x128xf32>
      tpu.vector_store %arg19[%c0_38, %c0_39], %75 {strides = array<i32>} : memref<16x128xf32, #tpu.memory_space<vmem>>, vector<16x128xf32>,
      %cst_40 = arith.constant 0.000000e+00 : f32
      %77 = vector.broadcast %cst_40 : f32 to vector<16x128xf32>
      %c0_41 = arith.constant 0 : index
      %c0_42 = arith.constant 0 : index
      %78 = vector.load %arg20[%c0_41, %c0_42] : memref<16x128xf32, #tpu.memory_space<vmem>>, vector<16x128xf32>
      tpu.vector_store %arg20[%c0_41, %c0_42], %77 {strides = array<i32>} : memref<16x128xf32, #tpu.memory_space<vmem>>, vector<16x128xf32>,
    } else {
    }
    %c0 = arith.constant 0 : index
    %c0_1 = arith.constant 0 : index
    %3 = vector.load %arg3[%c0, %c0_1] : memref<128x128xf32, #tpu.memory_space<vmem>>, vector<128x128xf32>
    %c0_2 = arith.constant 0 : index
    %c0_3 = arith.constant 0 : index
    %4 = vector.load %arg7[%c0_2, %c0_3] : memref<128x256xf32, #tpu.memory_space<vmem>>, vector<128x256xf32>
    %cst = arith.constant dense<0.000000e+00> : vector<128x256xf32>
    %5 = tpu.matmul %3, %4, %cst {dimension_numbers = #tpu.dot_dimension_numbers<[1], [0], [0], [1], [0, 0, 1, 1], [], []>} : vector<128x128xf32>, vector<128x256xf32>, vector<128x256xf32> -> vector<128x256xf32>
    %c0_4 = arith.constant 0 : index
    %c0_5 = arith.constant 0 : index
    %6 = vector.load %arg8[%c0_4, %c0_5] : memref<1x256xf32, #tpu.memory_space<vmem>>, vector<1x256xf32>
    %7 = vector.broadcast %6 : vector<1x256xf32> to vector<128x256xf32>
    %8 = arith.addf %5, %7 : vector<128x256xf32>
    %9 = arith.negf %8 : vector<128x256xf32>
    %10 = math.exp %9 : vector<128x256xf32>
    %cst_6 = arith.constant 1.000000e+00 : f32
    %11 = vector.broadcast %cst_6 : f32 to vector<128x256xf32>
    %12 = arith.addf %11, %10 : vector<128x256xf32>
    %13 = arith.divf %11, %12 : vector<128x256xf32>
    %14 = arith.mulf %8, %13 : vector<128x256xf32>
    %c0_7 = arith.constant 0 : index
    %c0_8 = arith.constant 0 : index
    %15 = vector.load %arg9[%c0_7, %c0_8] : memref<256x2xf32, #tpu.memory_space<vmem>>, vector<256x2xf32>
    %cst_9 = arith.constant dense<0.000000e+00> : vector<128x2xf32>
    %16 = tpu.matmul %14, %15, %cst_9 {dimension_numbers = #tpu.dot_dimension_numbers<[1], [0], [0], [1], [0, 0, 1, 1], [], []>} : vector<128x256xf32>, vector<256x2xf32>, vector<128x2xf32> -> vector<128x2xf32>
    %c0_10 = arith.constant 0 : index
    %c0_11 = arith.constant 0 : index
    %17 = vector.load %arg10[%c0_10, %c0_11] : memref<1x2xf32, #tpu.memory_space<vmem>>, vector<1x2xf32>
    %18 = vector.broadcast %17 : vector<1x2xf32> to vector<128x2xf32>
    %19 = arith.addf %16, %18 : vector<128x2xf32>
    %20 = vector.extract_strided_slice %19 {offsets = [0, 0], sizes = [128, 1], strides = [1, 1]} : vector<128x2xf32> to vector<128x1xf32>
    %21 = arith.negf %20 : vector<128x1xf32>
    %22 = math.exp %21 : vector<128x1xf32>
    %cst_12 = arith.constant 1.000000e+00 : f32
    %23 = vector.broadcast %cst_12 : f32 to vector<128x1xf32>
    %24 = arith.addf %23, %22 : vector<128x1xf32>
    %25 = arith.divf %23, %24 : vector<128x1xf32>
    %26 = vector.extract_strided_slice %19 {offsets = [0, 1], sizes = [128, 1], strides = [1, 1]} : vector<128x2xf32> to vector<128x1xf32>
    %c0_13 = arith.constant 0 : index
    %c0_14 = arith.constant 0 : index
    %27 = vector.load %arg18[%c0_13, %c0_14] : memref<128x1xf32, #tpu.memory_space<vmem>>, vector<128x1xf32>
    tpu.vector_store %arg18[%c0_13, %c0_14], %25 {strides = array<i32>} : memref<128x1xf32, #tpu.memory_space<vmem>>, vector<128x1xf32>,
    %c0_15 = arith.constant 0 : index
    %c0_16 = arith.constant 0 : index
    %28 = vector.load %arg6[%c0_15, %c0_16] : memref<1x128xi32, #tpu.memory_space<vmem>>, vector<1x128xi32>
    %29 = tpu.iota {dimensions = array<i32: 0>} : vector<16x128xi32>
    %30 = vector.broadcast %28 : vector<1x128xi32> to vector<16x128xi32>
    %31 = arith.cmpi eq, %29, %30 : vector<16x128xi32>
    %32 = arith.extui %31 : vector<16x128xi1> to vector<16x128xi32>
    %33 = arith.sitofp %32 : vector<16x128xi32> to vector<16x128xf32>
    %34 = arith.truncf %33 : vector<16x128xf32> to vector<16x128xbf16>
    %35 = vector.broadcast %25 : vector<128x1xf32> to vector<128x128xf32>
    %36 = arith.mulf %3, %35 : vector<128x128xf32>
    %37 = arith.truncf %36 : vector<128x128xf32> to vector<128x128xbf16>
    %c0_17 = arith.constant 0 : index
    %c0_18 = arith.constant 0 : index
    %38 = vector.load %arg19[%c0_17, %c0_18] : memref<16x128xf32, #tpu.memory_space<vmem>>, vector<16x128xf32>
    %cst_19 = arith.constant dense<0.000000e+00> : vector<16x128xf32>
    %39 = tpu.matmul %34, %37, %cst_19 {dimension_numbers = #tpu.dot_dimension_numbers<[1], [0], [0], [1], [0, 0, 1, 1], [], []>} : vector<16x128xbf16>, vector<128x128xbf16>, vector<16x128xf32> -> vector<16x128xf32>
    %40 = arith.addf %38, %39 : vector<16x128xf32>
    %c0_20 = arith.constant 0 : index
    %c0_21 = arith.constant 0 : index
    %41 = vector.load %arg19[%c0_20, %c0_21] : memref<16x128xf32, #tpu.memory_space<vmem>>, vector<16x128xf32>
    tpu.vector_store %arg19[%c0_20, %c0_21], %40 {strides = array<i32>} : memref<16x128xf32, #tpu.memory_space<vmem>>, vector<16x128xf32>,
    %42 = tpu.iota {dimensions = array<i32: 1>} : vector<128x16xi32>
    %c0_22 = arith.constant 0 : index
    %c0_23 = arith.constant 0 : index
    %43 = vector.load %arg5[%c0_22, %c0_23] : memref<128x1xi32, #tpu.memory_space<vmem>>, vector<128x1xi32>
    %c0_24 = arith.constant 0 : index
    %c0_25 = arith.constant 0 : index
    %44 = vector.load %arg4[%c0_24, %c0_25] : memref<128x1xi32, #tpu.memory_space<vmem>>, vector<128x1xi32>
    %45 = vector.broadcast %43 : vector<128x1xi32> to vector<128x16xi32>
    %46 = arith.cmpi eq, %45, %42 : vector<128x16xi32>
    %47 = arith.extui %46 : vector<128x16xi1> to vector<128x16xi32>
    %48 = arith.sitofp %47 : vector<128x16xi32> to vector<128x16xf32>
    %49 = vector.broadcast %44 : vector<128x1xi32> to vector<128x16xi32>
    %50 = arith.cmpi eq, %49, %42 : vector<128x16xi32>
    %51 = arith.extui %50 : vector<128x16xi1> to vector<128x16xi32>
    %52 = arith.sitofp %51 : vector<128x16xi32> to vector<128x16xf32>
    %53 = arith.subf %48, %52 : vector<128x16xf32>
    %54 = arith.truncf %53 : vector<128x16xf32> to vector<128x16xbf16>
    %c0_26 = arith.constant 0 : index
    %c0_27 = arith.constant 0 : index
    %55 = vector.load %arg2[%c0_26, %c0_27] : memref<16x128xf32, #tpu.memory_space<vmem>>, vector<16x128xf32>
    %56 = arith.truncf %55 : vector<16x128xf32> to vector<16x128xbf16>
    %cst_28 = arith.constant dense<0.000000e+00> : vector<128x128xf32>
    %57 = tpu.matmul %54, %56, %cst_28 {dimension_numbers = #tpu.dot_dimension_numbers<[1], [0], [0], [1], [0, 0, 1, 1], [], []>} : vector<128x16xbf16>, vector<16x128xbf16>, vector<128x128xf32> -> vector<128x128xf32>
    %58 = arith.mulf %57, %57 : vector<128x128xf32>
    %cst_29 = arith.constant dense<0.000000e+00> : vector<128xf32>
    %59 = vector.multi_reduction <add>, %58, %cst_29 [1] : vector<128x128xf32> to vector<128xf32>
    %60 = vector.shape_cast %59 : vector<128xf32> to vector<128x1xf32>
    %61 = math.sqrt %60 : vector<128x1xf32>
    %cst_30 = arith.constant 1.000000e+00 : f32
    %62 = vector.broadcast %cst_30 : f32 to vector<128x1xf32>
    %63 = arith.addf %61, %62 : vector<128x1xf32>
    %64 = arith.divf %26, %63 : vector<128x1xf32>
    %65 = vector.broadcast %64 : vector<128x1xf32> to vector<128x128xf32>
    %66 = arith.mulf %57, %65 : vector<128x128xf32>
    %67 = arith.truncf %66 : vector<128x128xf32> to vector<128x128xbf16>
    %c0_31 = arith.constant 0 : index
    %c0_32 = arith.constant 0 : index
    %68 = vector.load %arg20[%c0_31, %c0_32] : memref<16x128xf32, #tpu.memory_space<vmem>>, vector<16x128xf32>
    %cst_33 = arith.constant dense<0.000000e+00> : vector<16x128xf32>
    %69 = tpu.matmul %34, %67, %cst_33 {dimension_numbers = #tpu.dot_dimension_numbers<[1], [0], [0], [1], [0, 0, 1, 1], [], []>} : vector<16x128xbf16>, vector<128x128xbf16>, vector<16x128xf32> -> vector<16x128xf32>
    %70 = arith.addf %68, %69 : vector<16x128xf32>
    %c0_34 = arith.constant 0 : index
    %c0_35 = arith.constant 0 : index
    %71 = vector.load %arg20[%c0_34, %c0_35] : memref<16x128xf32, #tpu.memory_space<vmem>>, vector<16x128xf32>
    tpu.vector_store %arg20[%c0_34, %c0_35], %70 {strides = array<i32>} : memref<16x128xf32, #tpu.memory_space<vmem>>, vector<16x128xf32>,
    %c2_i32 = arith.constant 2 : i32
    %72 = arith.cmpi eq, %arg0, %c2_i32 : i32
    %73 = arith.extui %72 : i1 to i32
    %c0_i32_36 = arith.constant 0 : i32
    %74 = arith.cmpi ne, %73, %c0_i32_36 : i32
    scf.if %74 {
      %c0_37 = arith.constant 0 : index
      %c0_38 = arith.constant 0 : index
      %75 = vector.load %arg1[%c0_37, %c0_38] : memref<16x128xf32, #tpu.memory_space<vmem>>, vector<16x128xf32>
      %c0_39 = arith.constant 0 : index
      %c0_40 = arith.constant 0 : index
      %76 = vector.load %arg11[%c0_39, %c0_40] : memref<128x128xf32, #tpu.memory_space<vmem>>, vector<128x128xf32>
      %cst_41 = arith.constant dense<0.000000e+00> : vector<16x128xf32>
      %77 = tpu.matmul %75, %76, %cst_41 {dimension_numbers = #tpu.dot_dimension_numbers<[1], [0], [0], [1], [0, 0, 1, 1], [], []>} : vector<16x128xf32>, vector<128x128xf32>, vector<16x128xf32> -> vector<16x128xf32>
      %c0_42 = arith.constant 0 : index
      %c0_43 = arith.constant 0 : index
      %78 = vector.load %arg19[%c0_42, %c0_43] : memref<16x128xf32, #tpu.memory_space<vmem>>, vector<16x128xf32>
      %c0_44 = arith.constant 0 : index
      %c0_45 = arith.constant 0 : index
      %79 = vector.load %arg12[%c0_44, %c0_45] : memref<128x128xf32, #tpu.memory_space<vmem>>, vector<128x128xf32>
      %cst_46 = arith.constant dense<0.000000e+00> : vector<16x128xf32>
      %80 = tpu.matmul %78, %79, %cst_46 {dimension_numbers = #tpu.dot_dimension_numbers<[1], [0], [0], [1], [0, 0, 1, 1], [], []>} : vector<16x128xf32>, vector<128x128xf32>, vector<16x128xf32> -> vector<16x128xf32>
      %81 = arith.addf %77, %80 : vector<16x128xf32>
      %c0_47 = arith.constant 0 : index
      %c0_48 = arith.constant 0 : index
      %82 = vector.load %arg13[%c0_47, %c0_48] : memref<1x128xf32, #tpu.memory_space<vmem>>, vector<1x128xf32>
      %83 = vector.broadcast %82 : vector<1x128xf32> to vector<16x128xf32>
      %84 = arith.addf %81, %83 : vector<16x128xf32>
      %85 = arith.negf %84 : vector<16x128xf32>
      %86 = math.exp %85 : vector<16x128xf32>
      %cst_49 = arith.constant 1.000000e+00 : f32
      %87 = vector.broadcast %cst_49 : f32 to vector<16x128xf32>
      %88 = arith.addf %87, %86 : vector<16x128xf32>
      %89 = arith.divf %87, %88 : vector<16x128xf32>
      %90 = arith.mulf %84, %89 : vector<16x128xf32>
      %c0_50 = arith.constant 0 : index
      %c0_51 = arith.constant 0 : index
      %91 = vector.load %arg14[%c0_50, %c0_51] : memref<128x128xf32, #tpu.memory_space<vmem>>, vector<128x128xf32>
      %cst_52 = arith.constant dense<0.000000e+00> : vector<16x128xf32>
      %92 = tpu.matmul %90, %91, %cst_52 {dimension_numbers = #tpu.dot_dimension_numbers<[1], [0], [0], [1], [0, 0, 1, 1], [], []>} : vector<16x128xf32>, vector<128x128xf32>, vector<16x128xf32> -> vector<16x128xf32>
      %c0_53 = arith.constant 0 : index
      %c0_54 = arith.constant 0 : index
      %93 = vector.load %arg15[%c0_53, %c0_54] : memref<1x128xf32, #tpu.memory_space<vmem>>, vector<1x128xf32>
      %94 = vector.broadcast %93 : vector<1x128xf32> to vector<16x128xf32>
      %95 = arith.addf %92, %94 : vector<16x128xf32>
      %96 = arith.addf %95, %75 : vector<16x128xf32>
      %c0_55 = arith.constant 0 : index
      %c0_56 = arith.constant 0 : index
      %97 = vector.load %arg16[%c0_55, %c0_56] : memref<16x128xf32, #tpu.memory_space<vmem>>, vector<16x128xf32>
      tpu.vector_store %arg16[%c0_55, %c0_56], %96 {strides = array<i32>} : memref<16x128xf32, #tpu.memory_space<vmem>>, vector<16x128xf32>,
      %c0_57 = arith.constant 0 : index
      %c0_58 = arith.constant 0 : index
      %98 = vector.load %arg2[%c0_57, %c0_58] : memref<16x128xf32, #tpu.memory_space<vmem>>, vector<16x128xf32>
      %c0_59 = arith.constant 0 : index
      %c0_60 = arith.constant 0 : index
      %99 = vector.load %arg20[%c0_59, %c0_60] : memref<16x128xf32, #tpu.memory_space<vmem>>, vector<16x128xf32>
      %100 = arith.addf %98, %99 : vector<16x128xf32>
      %c0_61 = arith.constant 0 : index
      %c0_62 = arith.constant 0 : index
      %101 = vector.load %arg17[%c0_61, %c0_62] : memref<16x128xf32, #tpu.memory_space<vmem>>, vector<16x128xf32>
      tpu.vector_store %arg17[%c0_61, %c0_62], %100 {strides = array<i32>} : memref<16x128xf32, #tpu.memory_space<vmem>>, vector<16x128xf32>,
    } else {
    }
    return
  }
  func.func @transform_0(%arg0: i32) -> (i32, i32) {
    %c0_i32 = arith.constant 0 : i32
    %c0_i32_0 = arith.constant 0 : i32
    %c0_i32_1 = arith.constant 0 : i32
    return %c0_i32, %c0_i32_0 : i32, i32
  }
  func.func @transform_1(%arg0: i32) -> (i32, i32) {
    %c0_i32 = arith.constant 0 : i32
    %c0_i32_0 = arith.constant 0 : i32
    %c0_i32_1 = arith.constant 0 : i32
    return %c0_i32, %c0_i32_0 : i32, i32
  }
  func.func @transform_2(%arg0: i32) -> (i32, i32) {
    %c0_i32 = arith.constant 0 : i32
    %c0_i32_0 = arith.constant 0 : i32
    return %arg0, %c0_i32 : i32, i32
  }
  func.func @transform_3(%arg0: i32) -> (i32, i32) {
    %c0_i32 = arith.constant 0 : i32
    %c0_i32_0 = arith.constant 0 : i32
    return %arg0, %c0_i32 : i32, i32
  }
  func.func @transform_4(%arg0: i32) -> (i32, i32) {
    %c0_i32 = arith.constant 0 : i32
    %c0_i32_0 = arith.constant 0 : i32
    return %arg0, %c0_i32 : i32, i32
  }
  func.func @transform_5(%arg0: i32) -> (i32, i32) {
    %c0_i32 = arith.constant 0 : i32
    %c0_i32_0 = arith.constant 0 : i32
    return %c0_i32, %arg0 : i32, i32
  }
  func.func @transform_6(%arg0: i32) -> (i32, i32) {
    %c0_i32 = arith.constant 0 : i32
    %c0_i32_0 = arith.constant 0 : i32
    %c0_i32_1 = arith.constant 0 : i32
    return %c0_i32, %c0_i32_0 : i32, i32
  }
  func.func @transform_7(%arg0: i32) -> (i32, i32) {
    %c0_i32 = arith.constant 0 : i32
    %c0_i32_0 = arith.constant 0 : i32
    %c0_i32_1 = arith.constant 0 : i32
    return %c0_i32, %c0_i32_0 : i32, i32
  }
  func.func @transform_8(%arg0: i32) -> (i32, i32) {
    %c0_i32 = arith.constant 0 : i32
    %c0_i32_0 = arith.constant 0 : i32
    %c0_i32_1 = arith.constant 0 : i32
    return %c0_i32, %c0_i32_0 : i32, i32
  }
  func.func @transform_9(%arg0: i32) -> (i32, i32) {
    %c0_i32 = arith.constant 0 : i32
    %c0_i32_0 = arith.constant 0 : i32
    %c0_i32_1 = arith.constant 0 : i32
    return %c0_i32, %c0_i32_0 : i32, i32
  }
  func.func @transform_10(%arg0: i32) -> (i32, i32) {
    %c0_i32 = arith.constant 0 : i32
    %c0_i32_0 = arith.constant 0 : i32
    %c0_i32_1 = arith.constant 0 : i32
    return %c0_i32, %c0_i32_0 : i32, i32
  }
  func.func @transform_11(%arg0: i32) -> (i32, i32) {
    %c0_i32 = arith.constant 0 : i32
    %c0_i32_0 = arith.constant 0 : i32
    %c0_i32_1 = arith.constant 0 : i32
    return %c0_i32, %c0_i32_0 : i32, i32
  }
  func.func @transform_12(%arg0: i32) -> (i32, i32) {
    %c0_i32 = arith.constant 0 : i32
    %c0_i32_0 = arith.constant 0 : i32
    %c0_i32_1 = arith.constant 0 : i32
    return %c0_i32, %c0_i32_0 : i32, i32
  }
  func.func @transform_13(%arg0: i32) -> (i32, i32) {
    %c0_i32 = arith.constant 0 : i32
    %c0_i32_0 = arith.constant 0 : i32
    %c0_i32_1 = arith.constant 0 : i32
    return %c0_i32, %c0_i32_0 : i32, i32
  }
  func.func @transform_14(%arg0: i32) -> (i32, i32) {
    %c0_i32 = arith.constant 0 : i32
    %c0_i32_0 = arith.constant 0 : i32
    %c0_i32_1 = arith.constant 0 : i32
    return %c0_i32, %c0_i32_0 : i32, i32
  }
  func.func @transform_15(%arg0: i32) -> (i32, i32) {
    %c0_i32 = arith.constant 0 : i32
    %c0_i32_0 = arith.constant 0 : i32
    %c0_i32_1 = arith.constant 0 : i32
    return %c0_i32, %c0_i32_0 : i32, i32
  }
  func.func @transform_16(%arg0: i32) -> (i32, i32) {
    %c0_i32 = arith.constant 0 : i32
    %c0_i32_0 = arith.constant 0 : i32
    %c0_i32_1 = arith.constant 0 : i32
    return %c0_i32, %c0_i32_0 : i32, i32
  }
  func.func @transform_17(%arg0: i32) -> (i32, i32) {
    %c0_i32 = arith.constant 0 : i32
    %c0_i32_0 = arith.constant 0 : i32
    return %arg0, %c0_i32 : i32, i32
  }
}

</mosaic_0001>

<llo_original>
// kernel: _node_operation_impl.1
$region0: #{_node_operation_impl.1}
  #allocation0 [shape = 'u32[]', space=smem, size = 0x4, offset = 0x4, fixed_abs, tag = 'smem constant byte address 0x4 - core index']
  #allocation1 [shape = 'u32[144,128]{1,0:T(1,128)}', space=vmem, size = 0x12000, scoped, tag = 'internal scratch']
  #allocation2 [shape = 'f32[16,128]{1,0:T(8,128)}', space=vmem, size = 0x2000, scoped, tag = 'scratch operand']
  #allocation3 [shape = 'f32[16,128]{1,0:T(8,128)}', space=vmem, size = 0x2000, scoped, tag = 'scratch operand']
  %s0 = inlined_call_operand.vmem [shape: f32[16,128], index: 0, kind: input, shape index: {}]
  %s1 = inlined_call_operand.vmem [shape: f32[16,128], index: 1, kind: input, shape index: {}]
  %s2 = inlined_call_operand.vmem [shape: f32[384,128], index: 2, kind: input, shape index: {}]
  %s3 = inlined_call_operand.vmem [shape: s32[384,1], index: 3, kind: input, shape index: {}]
  %s4 = inlined_call_operand.vmem [shape: s32[384,1], index: 4, kind: input, shape index: {}]
  %s5 = inlined_call_operand.vmem [shape: s32[1,384], index: 5, kind: input, shape index: {}]
  %s6 = inlined_call_operand.vmem [shape: f32[128,256], index: 6, kind: input, shape index: {}]
  %s7 = inlined_call_operand.vmem [shape: f32[1,256], index: 7, kind: input, shape index: {}]
  %s8 = inlined_call_operand.vmem [shape: f32[256,2], index: 8, kind: input, shape index: {}]
  %s9 = inlined_call_operand.vmem [shape: f32[1,2], index: 9, kind: input, shape index: {}]
  %s10 = inlined_call_operand.vmem [shape: f32[128,128], index: 10, kind: input, shape index: {}]
  %s11 = inlined_call_operand.vmem [shape: f32[128,128], index: 11, kind: input, shape index: {}]
  %s12 = inlined_call_operand.vmem [shape: f32[1,128], index: 12, kind: input, shape index: {}]
  %s13 = inlined_call_operand.vmem [shape: f32[128,128], index: 13, kind: input, shape index: {}]
  %s14 = inlined_call_operand.vmem [shape: f32[1,128], index: 14, kind: input, shape index: {}]
  %s15 = inlined_call_operand.hbm [shape: f32[16,128], index: 15, kind: output, shape index: {0}]
  %s16 = inlined_call_operand.vmem [shape: f32[16,128], index: 16, kind: output, shape index: {1}]
  %s17 = inlined_call_operand.vmem [shape: f32[384,1], index: 17, kind: output, shape index: {2}]
  %18 = xla_tuple %s15, %s16, %s17
  %s19 = sld [smem:[#allocation0]]
  $region117: #{_node_operation_impl.1} parent=0
    _
  %s21 = ssub.s32 1, %s19
  %s22 = scalar_select 0, %s21, %s19
  $region1: #{_node_operation_impl.1} parent=0
    #allocation4 [shape = 'u8[8192]{0}', space=vmem, size = 0x2000, scoped, tag = 'output window, operand 0, single buffered']
    #allocation5 [shape = 's32[2]{0}', space=sflag, size = 0x8, scoped, tag = 'scoped memory for _node_operation_impl.1']
    %23 = vsyncpa [#allocation5], 0
    loop: start=0, step=1, limit=5
    $region2: #{_node_operation_impl.1} parent=1 // loop_pre_header
      _
    $region3: #{_node_operation_impl.1} parent=1 // loop_header
      %s25 = sphi 0, %s29
      %p26 = scmp.ge.s32.totalorder %s25, 5
      %s33 = sphi 0, %s33
      %s35 = sphi 0, %s33
      %s36 = sphi 0, %s35
      %s50 = sphi 0, %s36
      %s54 = sphi 0, %s54
      %s56 = sphi 0, %s54
      %s57 = sphi 0, %s56
      %s71 = sphi 0, %s57
      %s77 = sphi 0, %s79
      %s80 = sphi 0, %s77
      %s81 = sphi 0, %s80
      %s97 = sphi 0, %s81
      %s103 = sphi 0, %s105
      %s106 = sphi 0, %s103
      %s107 = sphi 0, %s106
      %s123 = sphi 0, %s107
      %s129 = sphi 0, %s131
      %s132 = sphi 0, %s129
      %s133 = sphi 0, %s132
      %s149 = sphi 0, %s133
      %s155 = sphi 0, %s157
      %s158 = sphi 0, %s155
      %s159 = sphi 0, %s158
      %s175 = sphi 0, %s159
      %s179 = sphi 0, %s179
      %s181 = sphi 0, %s179
      %s182 = sphi 0, %s181
      %s196 = sphi 0, %s182
      %s200 = sphi 0, %s200
      %s202 = sphi 0, %s200
      %s203 = sphi 0, %s202
      %s217 = sphi 0, %s203
      %s221 = sphi 0, %s221
      %s223 = sphi 0, %s221
      %s224 = sphi 0, %s223
      %s238 = sphi 0, %s224
      %s242 = sphi 0, %s242
      %s244 = sphi 0, %s242
      %s245 = sphi 0, %s244
      %s259 = sphi 0, %s245
      %s263 = sphi 0, %s263
      %s265 = sphi 0, %s263
      %s266 = sphi 0, %s265
      %s280 = sphi 0, %s266
      %s284 = sphi 0, %s284
      %s286 = sphi 0, %s284
      %s287 = sphi 0, %s286
      %s301 = sphi 0, %s287
      %s305 = sphi 0, %s305
      %s307 = sphi 0, %s305
      %s308 = sphi 0, %s307
      %s322 = sphi 0, %s308
      %s326 = sphi 0, %s326
      %s328 = sphi 0, %s326
      %s329 = sphi 0, %s328
      %s343 = sphi 0, %s329
      %s347 = sphi 0, %s347
      %s349 = sphi 0, %s347
      %s350 = sphi 0, %s349
      %s364 = sphi 0, %s350
      %s368 = sphi 0, %s368
      %s370 = sphi 0, %s368
      %s371 = sphi 0, %s370
      %s385 = sphi 0, %s371
      %s389 = sphi 0, %s389
      %s391 = sphi 0, %s389
      %s392 = sphi 0, %s391
      %s406 = sphi 0, %s392
      %s412 = sphi 0, %s414
      %s415 = sphi 0, %s412
      %s416 = sphi 0, %s415
      %s432 = sphi 0, %s416
    $region4: #{_node_operation_impl.1} parent=1 // loop_header_branch
      %28 = sbr.rel (%p26) target = $region8
    $region5: #{_node_operation_impl.1} parent=1 // loop_body
      %s30 = ssub.s32 %s25, 1
      %s31 = ssub.s32 %s25, 2
      %s32 = sadd.s32 %s25, 1
      %s34 = sadd.s32 %s33, 1
      %p37 = scmp.eq.s32.totalorder %s25, 2
      %p38 = scmp.ne.s32.totalorder %s33, %s35
      %p39 = scmp.eq.s32.totalorder %s25, 0
      %p40 = por %p38, %p39
      %p41 = scmp.ne.s32.totalorder %s33, %s35
      %p42 = scmp.eq.s32.totalorder %s30, 2
      %p43 = por %p41, %p42
      %p44 = scmp.ne.s32.totalorder %s35, %s36
      %p45 = scmp.eq.s32.totalorder %s30, 0
      %p46 = por %p44, %p45
      %p47 = scmp.ne.s32.totalorder %s35, %s36
      %p48 = scmp.eq.s32.totalorder %s31, 2
      %p49 = por %p47, %p48
      %p51 = scmp.ne.s32.totalorder %s36, %s50
      %p52 = scmp.eq.s32.totalorder %s31, 0
      %p53 = por %p51, %p52
      %s55 = sadd.s32 %s54, 1
      %p58 = scmp.eq.s32.totalorder %s25, 2
      %p59 = scmp.ne.s32.totalorder %s54, %s56
      %p60 = scmp.eq.s32.totalorder %s25, 0
      %p61 = por %p59, %p60
      %p62 = scmp.ne.s32.totalorder %s54, %s56
      %p63 = scmp.eq.s32.totalorder %s30, 2
      %p64 = por %p62, %p63
      %p65 = scmp.ne.s32.totalorder %s56, %s57
      %p66 = scmp.eq.s32.totalorder %s30, 0
      %p67 = por %p65, %p66
      %p68 = scmp.ne.s32.totalorder %s56, %s57
      %p69 = scmp.eq.s32.totalorder %s31, 2
      %p70 = por %p68, %p69
      %p72 = scmp.ne.s32.totalorder %s57, %s71
      %p73 = scmp.eq.s32.totalorder %s31, 0
      %p74 = por %p72, %p73
      %s75 = ssub.s32 %s25, %s32
      %p76 = scmp.eq.s32.totalorder %s75, 0
      %s78 = sadd.s32 %s77, 1
      %s79 = scalar_select %p76, %s77, %s78
      %p82 = pneg %p76
      %p83 = scmp.eq.s32.totalorder %s25, 2
      %p84 = por %p82, %p83
      %p85 = scmp.ne.s32.totalorder %s77, %s80
      %p86 = scmp.eq.s32.totalorder %s25, 0
      %p87 = por %p85, %p86
      %p88 = scmp.ne.s32.totalorder %s77, %s80
      %p89 = scmp.eq.s32.totalorder %s30, 2
      %p90 = por %p88, %p89
      %p91 = scmp.ne.s32.totalorder %s80, %s81
      %p92 = scmp.eq.s32.totalorder %s30, 0
      %p93 = por %p91, %p92
      %p94 = scmp.ne.s32.totalorder %s80, %s81
      %p95 = scmp.eq.s32.totalorder %s31, 2
      %p96 = por %p94, %p95
      %p98 = scmp.ne.s32.totalorder %s81, %s97
      %p99 = scmp.eq.s32.totalorder %s31, 0
      %p100 = por %p98, %p99
      %s101 = ssub.s32 %s25, %s32
      %p102 = scmp.eq.s32.totalorder %s101, 0
      %s104 = sadd.s32 %s103, 1
      %s105 = scalar_select %p102, %s103, %s104
      %p108 = pneg %p102
      %p109 = scmp.eq.s32.totalorder %s25, 2
      %p110 = por %p108, %p109
      %p111 = scmp.ne.s32.totalorder %s103, %s106
      %p112 = scmp.eq.s32.totalorder %s25, 0
      %p113 = por %p111, %p112
      %p114 = scmp.ne.s32.totalorder %s103, %s106
      %p115 = scmp.eq.s32.totalorder %s30, 2
      %p116 = por %p114, %p115
      %p117 = scmp.ne.s32.totalorder %s106, %s107
      %p118 = scmp.eq.s32.totalorder %s30, 0
      %p119 = por %p117, %p118
      %p120 = scmp.ne.s32.totalorder %s106, %s107
      %p121 = scmp.eq.s32.totalorder %s31, 2
      %p122 = por %p120, %p121
      %p124 = scmp.ne.s32.totalorder %s107, %s123
      %p125 = scmp.eq.s32.totalorder %s31, 0
      %p126 = por %p124, %p125
      %s127 = ssub.s32 %s25, %s32
      %p128 = scmp.eq.s32.totalorder %s127, 0
      %s130 = sadd.s32 %s129, 1
      %s131 = scalar_select %p128, %s129, %s130
      %p134 = pneg %p128
      %p135 = scmp.eq.s32.totalorder %s25, 2
      %p136 = por %p134, %p135
      %p137 = scmp.ne.s32.totalorder %s129, %s132
      %p138 = scmp.eq.s32.totalorder %s25, 0
      %p139 = por %p137, %p138
      %p140 = scmp.ne.s32.totalorder %s129, %s132
      %p141 = scmp.eq.s32.totalorder %s30, 2
      %p142 = por %p140, %p141
      %p143 = scmp.ne.s32.totalorder %s132, %s133
      %p144 = scmp.eq.s32.totalorder %s30, 0
      %p145 = por %p143, %p144
      %p146 = scmp.ne.s32.totalorder %s132, %s133
      %p147 = scmp.eq.s32.totalorder %s31, 2
      %p148 = por %p146, %p147
      %p150 = scmp.ne.s32.totalorder %s133, %s149
      %p151 = scmp.eq.s32.totalorder %s31, 0
      %p152 = por %p150, %p151
      %s153 = ssub.s32 %s25, %s32
      %p154 = scmp.eq.s32.totalorder %s153, 0
      %s156 = sadd.s32 %s155, 1
      %s157 = scalar_select %p154, %s155, %s156
      %p160 = pneg %p154
      %p161 = scmp.eq.s32.totalorder %s25, 2
      %p162 = por %p160, %p161
      %p163 = scmp.ne.s32.totalorder %s155, %s158
      %p164 = scmp.eq.s32.totalorder %s25, 0
      %p165 = por %p163, %p164
      %p166 = scmp.ne.s32.totalorder %s155, %s158
      %p167 = scmp.eq.s32.totalorder %s30, 2
      %p168 = por %p166, %p167
      %p169 = scmp.ne.s32.totalorder %s158, %s159
      %p170 = scmp.eq.s32.totalorder %s30, 0
      %p171 = por %p169, %p170
      %p172 = scmp.ne.s32.totalorder %s158, %s159
      %p173 = scmp.eq.s32.totalorder %s31, 2
      %p174 = por %p172, %p173
      %p176 = scmp.ne.s32.totalorder %s159, %s175
      %p177 = scmp.eq.s32.totalorder %s31, 0
      %p178 = por %p176, %p177
      %s180 = sadd.s32 %s179, 1
      %p183 = scmp.eq.s32.totalorder %s25, 2
      %p184 = scmp.ne.s32.totalorder %s179, %s181
      %p185 = scmp.eq.s32.totalorder %s25, 0
      %p186 = por %p184, %p185
      %p187 = scmp.ne.s32.totalorder %s179, %s181
      %p188 = scmp.eq.s32.totalorder %s30, 2
      %p189 = por %p187, %p188
      %p190 = scmp.ne.s32.totalorder %s181, %s182
      %p191 = scmp.eq.s32.totalorder %s30, 0
      %p192 = por %p190, %p191
      %p193 = scmp.ne.s32.totalorder %s181, %s182
      %p194 = scmp.eq.s32.totalorder %s31, 2
      %p195 = por %p193, %p194
      %p197 = scmp.ne.s32.totalorder %s182, %s196
      %p198 = scmp.eq.s32.totalorder %s31, 0
      %p199 = por %p197, %p198
      %s201 = sadd.s32 %s200, 1
      %p204 = scmp.eq.s32.totalorder %s25, 2
      %p205 = scmp.ne.s32.totalorder %s200, %s202
      %p206 = scmp.eq.s32.totalorder %s25, 0
      %p207 = por %p205, %p206
      %p208 = scmp.ne.s32.totalorder %s200, %s202
      %p209 = scmp.eq.s32.totalorder %s30, 2
      %p210 = por %p208, %p209
      %p211 = scmp.ne.s32.totalorder %s202, %s203
      %p212 = scmp.eq.s32.totalorder %s30, 0
      %p213 = por %p211, %p212
      %p214 = scmp.ne.s32.totalorder %s202, %s203
      %p215 = scmp.eq.s32.totalorder %s31, 2
      %p216 = por %p214, %p215
      %p218 = scmp.ne.s32.totalorder %s203, %s217
      %p219 = scmp.eq.s32.totalorder %s31, 0
      %p220 = por %p218, %p219
      %s222 = sadd.s32 %s221, 1
      %p225 = scmp.eq.s32.totalorder %s25, 2
      %p226 = scmp.ne.s32.totalorder %s221, %s223
      %p227 = scmp.eq.s32.totalorder %s25, 0
      %p228 = por %p226, %p227
      %p229 = scmp.ne.s32.totalorder %s221, %s223
      %p230 = scmp.eq.s32.totalorder %s30, 2
      %p231 = por %p229, %p230
      %p232 = scmp.ne.s32.totalorder %s223, %s224
      %p233 = scmp.eq.s32.totalorder %s30, 0
      %p234 = por %p232, %p233
      %p235 = scmp.ne.s32.totalorder %s223, %s224
      %p236 = scmp.eq.s32.totalorder %s31, 2
      %p237 = por %p235, %p236
      %p239 = scmp.ne.s32.totalorder %s224, %s238
      %p240 = scmp.eq.s32.totalorder %s31, 0
      %p241 = por %p239, %p240
      %s243 = sadd.s32 %s242, 1
      %p246 = scmp.eq.s32.totalorder %s25, 2
      %p247 = scmp.ne.s32.totalorder %s242, %s244
      %p248 = scmp.eq.s32.totalorder %s25, 0
      %p249 = por %p247, %p248
      %p250 = scmp.ne.s32.totalorder %s242, %s244
      %p251 = scmp.eq.s32.totalorder %s30, 2
      %p252 = por %p250, %p251
      %p253 = scmp.ne.s32.totalorder %s244, %s245
      %p254 = scmp.eq.s32.totalorder %s30, 0
      %p255 = por %p253, %p254
      %p256 = scmp.ne.s32.totalorder %s244, %s245
      %p257 = scmp.eq.s32.totalorder %s31, 2
      %p258 = por %p256, %p257
      %p260 = scmp.ne.s32.totalorder %s245, %s259
      %p261 = scmp.eq.s32.totalorder %s31, 0
      %p262 = por %p260, %p261
      %s264 = sadd.s32 %s263, 1
      %p267 = scmp.eq.s32.totalorder %s25, 2
      %p268 = scmp.ne.s32.totalorder %s263, %s265
      %p269 = scmp.eq.s32.totalorder %s25, 0
      %p270 = por %p268, %p269
      %p271 = scmp.ne.s32.totalorder %s263, %s265
      %p272 = scmp.eq.s32.totalorder %s30, 2
      %p273 = por %p271, %p272
      %p274 = scmp.ne.s32.totalorder %s265, %s266
      %p275 = scmp.eq.s32.totalorder %s30, 0
      %p276 = por %p274, %p275
      %p277 = scmp.ne.s32.totalorder %s265, %s266
      %p278 = scmp.eq.s32.totalorder %s31, 2
      %p279 = por %p277, %p278
      %p281 = scmp.ne.s32.totalorder %s266, %s280
      %p282 = scmp.eq.s32.totalorder %s31, 0
      %p283 = por %p281, %p282
      %s285 = sadd.s32 %s284, 1
      %p288 = scmp.eq.s32.totalorder %s25, 2
      %p289 = scmp.ne.s32.totalorder %s284, %s286
      %p290 = scmp.eq.s32.totalorder %s25, 0
      %p291 = por %p289, %p290
      %p292 = scmp.ne.s32.totalorder %s284, %s286
      %p293 = scmp.eq.s32.totalorder %s30, 2
      %p294 = por %p292, %p293
      %p295 = scmp.ne.s32.totalorder %s286, %s287
      %p296 = scmp.eq.s32.totalorder %s30, 0
      %p297 = por %p295, %p296
      %p298 = scmp.ne.s32.totalorder %s286, %s287
      %p299 = scmp.eq.s32.totalorder %s31, 2
      %p300 = por %p298, %p299
      %p302 = scmp.ne.s32.totalorder %s287, %s301
      %p303 = scmp.eq.s32.totalorder %s31, 0
      %p304 = por %p302, %p303
      %s306 = sadd.s32 %s305, 1
      %p309 = scmp.eq.s32.totalorder %s25, 2
      %p310 = scmp.ne.s32.totalorder %s305, %s307
      %p311 = scmp.eq.s32.totalorder %s25, 0
      %p312 = por %p310, %p311
      %p313 = scmp.ne.s32.totalorder %s305, %s307
      %p314 = scmp.eq.s32.totalorder %s30, 2
      %p315 = por %p313, %p314
      %p316 = scmp.ne.s32.totalorder %s307, %s308
      %p317 = scmp.eq.s32.totalorder %s30, 0
      %p318 = por %p316, %p317
      %p319 = scmp.ne.s32.totalorder %s307, %s308
      %p320 = scmp.eq.s32.totalorder %s31, 2
      %p321 = por %p319, %p320
      %p323 = scmp.ne.s32.totalorder %s308, %s322
      %p324 = scmp.eq.s32.totalorder %s31, 0
      %p325 = por %p323, %p324
      %s327 = sadd.s32 %s326, 1
      %p330 = scmp.eq.s32.totalorder %s25, 2
      %p331 = scmp.ne.s32.totalorder %s326, %s328
      %p332 = scmp.eq.s32.totalorder %s25, 0
      %p333 = por %p331, %p332
      %p334 = scmp.ne.s32.totalorder %s326, %s328
      %p335 = scmp.eq.s32.totalorder %s30, 2
      %p336 = por %p334, %p335
      %p337 = scmp.ne.s32.totalorder %s328, %s329
      %p338 = scmp.eq.s32.totalorder %s30, 0
      %p339 = por %p337, %p338
      %p340 = scmp.ne.s32.totalorder %s328, %s329
      %p341 = scmp.eq.s32.totalorder %s31, 2
      %p342 = por %p340, %p341
      %p344 = scmp.ne.s32.totalorder %s329, %s343
      %p345 = scmp.eq.s32.totalorder %s31, 0
      %p346 = por %p344, %p345
      %s348 = sadd.s32 %s347, 1
      %p351 = scmp.eq.s32.totalorder %s25, 2
      %p352 = scmp.ne.s32.totalorder %s347, %s349
      %p353 = scmp.eq.s32.totalorder %s25, 0
      %p354 = por %p352, %p353
      %p355 = scmp.ne.s32.totalorder %s347, %s349
      %p356 = scmp.eq.s32.totalorder %s30, 2
      %p357 = por %p355, %p356
      %p358 = scmp.ne.s32.totalorder %s349, %s350
      %p359 = scmp.eq.s32.totalorder %s30, 0
      %p360 = por %p358, %p359
      %p361 = scmp.ne.s32.totalorder %s349, %s350
      %p362 = scmp.eq.s32.totalorder %s31, 2
      %p363 = por %p361, %p362
      %p365 = scmp.ne.s32.totalorder %s350, %s364
      %p366 = scmp.eq.s32.totalorder %s31, 0
      %p367 = por %p365, %p366
      %s369 = sadd.s32 %s368, 1
      %p372 = scmp.eq.s32.totalorder %s25, 2
      %p373 = scmp.ne.s32.totalorder %s368, %s370
      %p374 = scmp.eq.s32.totalorder %s25, 0
      %p375 = por %p373, %p374
      %p376 = scmp.ne.s32.totalorder %s368, %s370
      %p377 = scmp.eq.s32.totalorder %s30, 2
      %p378 = por %p376, %p377
      %p379 = scmp.ne.s32.totalorder %s370, %s371
      %p380 = scmp.eq.s32.totalorder %s30, 0
      %p381 = por %p379, %p380
      %p382 = scmp.ne.s32.totalorder %s370, %s371
      %p383 = scmp.eq.s32.totalorder %s31, 2
      %p384 = por %p382, %p383
      %p386 = scmp.ne.s32.totalorder %s371, %s385
      %p387 = scmp.eq.s32.totalorder %s31, 0
      %p388 = por %p386, %p387
      %s390 = sadd.s32 %s389, 1
      %p393 = scmp.eq.s32.totalorder %s25, 2
      %p394 = scmp.ne.s32.totalorder %s389, %s391
      %p395 = scmp.eq.s32.totalorder %s25, 0
      %p396 = por %p394, %p395
      %p397 = scmp.ne.s32.totalorder %s389, %s391
      %p398 = scmp.eq.s32.totalorder %s30, 2
      %p399 = por %p397, %p398
      %p400 = scmp.ne.s32.totalorder %s391, %s392
      %p401 = scmp.eq.s32.totalorder %s30, 0
      %p402 = por %p400, %p401
      %p403 = scmp.ne.s32.totalorder %s391, %s392
      %p404 = scmp.eq.s32.totalorder %s31, 2
      %p405 = por %p403, %p404
      %p407 = scmp.ne.s32.totalorder %s392, %s406
      %p408 = scmp.eq.s32.totalorder %s31, 0
      %p409 = por %p407, %p408
      %s410 = ssub.s32 %s25, %s32
      %p411 = scmp.eq.s32.totalorder %s410, 0
      %s413 = sadd.s32 %s412, 1
      %s414 = scalar_select %p411, %s412, %s413
      %p417 = pneg %p411
      %p418 = scmp.eq.s32.totalorder %s25, 2
      %p419 = por %p417, %p418
      %p420 = scmp.ne.s32.totalorder %s412, %s415
      %p421 = scmp.eq.s32.totalorder %s25, 0
      %p422 = por %p420, %p421
      %p423 = scmp.ne.s32.totalorder %s412, %s415
      %p424 = scmp.eq.s32.totalorder %s30, 2
      %p425 = por %p423, %p424
      %p426 = scmp.ne.s32.totalorder %s415, %s416
      %p427 = scmp.eq.s32.totalorder %s30, 0
      %p428 = por %p426, %p427
      %p429 = scmp.ne.s32.totalorder %s415, %s416
      %p430 = scmp.eq.s32.totalorder %s31, 2
      %p431 = por %p429, %p430
      %p433 = scmp.ne.s32.totalorder %s416, %s432
      %p434 = scmp.eq.s32.totalorder %s31, 0
      %p435 = por %p433, %p434
      %p436 = scmp.le.s32.totalorder 1, %s25
      %p437 = scmp.lt.s32.totalorder %s25, 4
      %p438 = pnand %p436, %p437
      %p439 = pneg %p438
      // Predicated region
      $region9: #{_node_operation_impl.1} parent=5 // pred_check
        _
      $region10: #{_node_operation_impl.1} parent=5 // pred_check_branch
        %441 = sbr.rel (%p438) target = $region12
      $region11: #{_node_operation_impl.1} parent=5 // pred_region
        %s442 = ssub.s32 %s25, 1
        // Predicated region
        $region13: #{_node_operation_impl.1} parent=11 // pred_check
          %p443 = pneg %p46
        $region14: #{_node_operation_impl.1} parent=11 // pred_check_branch
          %445 = sbr.rel (%p443) target = $region16
        $region15: #{_node_operation_impl.1} parent=11 // pred_region
          _
        $region16: #{_node_operation_impl.1} parent=11 // pred_fallthru
          _
        // Predicated region
        $region17: #{_node_operation_impl.1} parent=11 // pred_check
          %p446 = pneg %p67
        $region18: #{_node_operation_impl.1} parent=11 // pred_check_branch
          %448 = sbr.rel (%p446) target = $region20
        $region19: #{_node_operation_impl.1} parent=11 // pred_region
          _
        $region20: #{_node_operation_impl.1} parent=11 // pred_fallthru
          _
        // Predicated region
        $region21: #{_node_operation_impl.1} parent=11 // pred_check
          %p449 = pneg %p192
        $region22: #{_node_operation_impl.1} parent=11 // pred_check_branch
          %451 = sbr.rel (%p449) target = $region24
        $region23: #{_node_operation_impl.1} parent=11 // pred_region
          _
        $region24: #{_node_operation_impl.1} parent=11 // pred_fallthru
          _
        // Predicated region
        $region25: #{_node_operation_impl.1} parent=11 // pred_check
          %p452 = pneg %p213
        $region26: #{_node_operation_impl.1} parent=11 // pred_check_branch
          %454 = sbr.rel (%p452) target = $region28
        $region27: #{_node_operation_impl.1} parent=11 // pred_region
          _
        $region28: #{_node_operation_impl.1} parent=11 // pred_fallthru
          _
        // Predicated region
        $region29: #{_node_operation_impl.1} parent=11 // pred_check
          %p455 = pneg %p234
        $region30: #{_node_operation_impl.1} parent=11 // pred_check_branch
          %457 = sbr.rel (%p455) target = $region32
        $region31: #{_node_operation_impl.1} parent=11 // pred_region
          _
        $region32: #{_node_operation_impl.1} parent=11 // pred_fallthru
          _
        // Predicated region
        $region33: #{_node_operation_impl.1} parent=11 // pred_check
          %p458 = pneg %p255
        $region34: #{_node_operation_impl.1} parent=11 // pred_check_branch
          %460 = sbr.rel (%p458) target = $region36
        $region35: #{_node_operation_impl.1} parent=11 // pred_region
          _
        $region36: #{_node_operation_impl.1} parent=11 // pred_fallthru
          _
        // Predicated region
        $region37: #{_node_operation_impl.1} parent=11 // pred_check
          %p461 = pneg %p276
        $region38: #{_node_operation_impl.1} parent=11 // pred_check_branch
          %463 = sbr.rel (%p461) target = $region40
        $region39: #{_node_operation_impl.1} parent=11 // pred_region
          _
        $region40: #{_node_operation_impl.1} parent=11 // pred_fallthru
          _
        // Predicated region
        $region41: #{_node_operation_impl.1} parent=11 // pred_check
          %p464 = pneg %p297
        $region42: #{_node_operation_impl.1} parent=11 // pred_check_branch
          %466 = sbr.rel (%p464) target = $region44
        $region43: #{_node_operation_impl.1} parent=11 // pred_region
          _
        $region44: #{_node_operation_impl.1} parent=11 // pred_fallthru
          _
        // Predicated region
        $region45: #{_node_operation_impl.1} parent=11 // pred_check
          %p467 = pneg %p318
        $region46: #{_node_operation_impl.1} parent=11 // pred_check_branch
          %469 = sbr.rel (%p467) target = $region48
        $region47: #{_node_operation_impl.1} parent=11 // pred_region
          _
        $region48: #{_node_operation_impl.1} parent=11 // pred_fallthru
          _
        // Predicated region
        $region49: #{_node_operation_impl.1} parent=11 // pred_check
          %p470 = pneg %p339
        $region50: #{_node_operation_impl.1} parent=11 // pred_check_branch
          %472 = sbr.rel (%p470) target = $region52
        $region51: #{_node_operation_impl.1} parent=11 // pred_region
          _
        $region52: #{_node_operation_impl.1} parent=11 // pred_fallthru
          _
        // Predicated region
        $region53: #{_node_operation_impl.1} parent=11 // pred_check
          %p473 = pneg %p360
        $region54: #{_node_operation_impl.1} parent=11 // pred_check_branch
          %475 = sbr.rel (%p473) target = $region56
        $region55: #{_node_operation_impl.1} parent=11 // pred_region
          _
        $region56: #{_node_operation_impl.1} parent=11 // pred_fallthru
          _
      $region12: #{_node_operation_impl.1} parent=5 // pred_fallthru
        _
      %p476 = scmp.lt.s32.totalorder %s25, 3
      // Predicated region
      $region57: #{_node_operation_impl.1} parent=5 // pred_check
        %p477 = pneg %p476
      $region58: #{_node_operation_impl.1} parent=5 // pred_check_branch
        %479 = sbr.rel (%p477) target = $region60
      $region59: #{_node_operation_impl.1} parent=5 // pred_region
        // Predicated region
        $region61: #{_node_operation_impl.1} parent=59 // pred_check
          %p480 = pneg %p87
        $region62: #{_node_operation_impl.1} parent=59 // pred_check_branch
          %482 = sbr.rel (%p480) target = $region64
        $region63: #{_node_operation_impl.1} parent=59 // pred_region
          %s483 = smul.u32 16, %s25
          %p484 = scmp.lt.s32.totalorder %s483, 47
          %s485 = scalar_select %p484, %s483, 47
          %s486 = smul.addr %s485, 8
          %s487 = scalar_lea.vmem %s2, %s486
          %s488 = smul.u32 16, %s25
        $region64: #{_node_operation_impl.1} parent=59 // pred_fallthru
          _
        // Predicated region
        $region65: #{_node_operation_impl.1} parent=59 // pred_check
          %p489 = pneg %p113
        $region66: #{_node_operation_impl.1} parent=59 // pred_check_branch
          %491 = sbr.rel (%p489) target = $region68
        $region67: #{_node_operation_impl.1} parent=59 // pred_region
          %s492 = smul.u32 16, %s25
          %p493 = scmp.lt.s32.totalorder %s492, 47
          %s494 = scalar_select %p493, %s492, 47
          %s495 = smul.addr %s494, 8
          %s496 = scalar_lea.vmem %s3, %s495
          %s497 = smul.u32 16, %s25
        $region68: #{_node_operation_impl.1} parent=59 // pred_fallthru
          _
        // Predicated region
        $region69: #{_node_operation_impl.1} parent=59 // pred_check
          %p498 = pneg %p139
        $region70: #{_node_operation_impl.1} parent=59 // pred_check_branch
          %500 = sbr.rel (%p498) target = $region72
        $region71: #{_node_operation_impl.1} parent=59 // pred_region
          %s501 = smul.u32 16, %s25
          %p502 = scmp.lt.s32.totalorder %s501, 47
          %s503 = scalar_select %p502, %s501, 47
          %s504 = smul.addr %s503, 8
          %s505 = scalar_lea.vmem %s4, %s504
          %s506 = smul.u32 16, %s25
        $region72: #{_node_operation_impl.1} parent=59 // pred_fallthru
          _
        // Predicated region
        $region73: #{_node_operation_impl.1} parent=59 // pred_check
          %p507 = pneg %p165
        $region74: #{_node_operation_impl.1} parent=59 // pred_check_branch
          %509 = sbr.rel (%p507) target = $region76
        $region75: #{_node_operation_impl.1} parent=59 // pred_region
          %p510 = scmp.lt.s32.totalorder %s25, 2
          %s511 = scalar_select %p510, %s25, 2
          %s512 = scalar_lea.vmem %s5, %s511
        $region76: #{_node_operation_impl.1} parent=59 // pred_fallthru
          _
      $region60: #{_node_operation_impl.1} parent=5 // pred_fallthru
        _
      %p513 = scmp.le.s32.totalorder 1, %s25
      %p514 = scmp.lt.s32.totalorder %s25, 4
      %p515 = pnand %p513, %p514
      %p516 = pneg %p515
      // Predicated region
      $region77: #{_node_operation_impl.1} parent=5 // pred_check
        _
      $region78: #{_node_operation_impl.1} parent=5 // pred_check_branch
        %518 = sbr.rel (%p515) target = $region80
      $region79: #{_node_operation_impl.1} parent=5 // pred_region
        %s519 = ssub.s32 %s25, 1
        %p520 = pneg %p46
        %p521 = pneg %p43
        %p522 = pneg %p67
        %p523 = pneg %p64
        %s524 = smul.u32 16, %s30
        %p525 = scmp.lt.s32.totalorder %s524, 47
        %s526 = scalar_select %p525, %s524, 47
        %s527 = smul.addr %s526, 8
        %s528 = scalar_lea.vmem %s2, %s527
        %p529 = pneg %p93
        %p530 = pneg %p90
        %s531 = smul.u32 16, %s30
        %p532 = scmp.lt.s32.totalorder %s531, 47
        %s533 = scalar_select %p532, %s531, 47
        %s534 = smul.addr %s533, 8
        %s535 = scalar_lea.vmem %s3, %s534
        %p536 = pneg %p119
        %p537 = pneg %p116
        %s538 = smul.u32 16, %s30
        %p539 = scmp.lt.s32.totalorder %s538, 47
        %s540 = scalar_select %p539, %s538, 47
        %s541 = smul.addr %s540, 8
        %s542 = scalar_lea.vmem %s4, %s541
        %p543 = pneg %p145
        %p544 = pneg %p142
        %p545 = scmp.lt.s32.totalorder %s30, 2
        %s546 = scalar_select %p545, %s30, 2
        %s547 = scalar_lea.vmem %s5, %s546
        %p548 = pneg %p171
        %p549 = pneg %p168
        %p550 = pneg %p192
        %p551 = pneg %p189
        %p552 = pneg %p213
        %p553 = pneg %p210
        %p554 = pneg %p234
        %p555 = pneg %p231
        %p556 = pneg %p255
        %p557 = pneg %p252
        %p558 = pneg %p276
        %p559 = pneg %p273
        %p560 = pneg %p297
        %p561 = pneg %p294
        %p562 = pneg %p318
        %p563 = pneg %p315
        %p564 = pneg %p339
        %p565 = pneg %p336
        %p566 = pneg %p360
        %p567 = pneg %p357
        %p568 = pneg %p381
        %p569 = pneg %p378
        %p570 = pneg %p402
        %p571 = pneg %p399
        %p572 = pneg %p428
        %p573 = pneg %p425
        %s574 = smul.u32 16, %s30
        %p575 = scmp.lt.s32.totalorder %s574, 47
        %s576 = scalar_select %p575, %s574, 47
        %s577 = smul.addr %s576, 8
        %s578 = scalar_lea.vmem %s17, %s577
        %s579 = smul.u32 16, %s30
        %p580 = scmp.lt.s32.totalorder %s579, 47
        %s581 = scalar_select %p580, %s579, 47
        %s582 = smul.addr %s581, 8
        %s583 = scalar_lea.vmem %s2, %s582
        %s584 = smul.u32 16, %s30
        %s585 = smul.u32 16, %s30
        %p586 = scmp.lt.s32.totalorder %s585, 47
        %s587 = scalar_select %p586, %s585, 47
        %s588 = smul.addr %s587, 8
        %s589 = scalar_lea.vmem %s3, %s588
        %s590 = smul.u32 16, %s30
        %s591 = smul.u32 16, %s30
        %p592 = scmp.lt.s32.totalorder %s591, 47
        %s593 = scalar_select %p592, %s591, 47
        %s594 = smul.addr %s593, 8
        %s595 = scalar_lea.vmem %s4, %s594
        %s596 = smul.u32 16, %s30
        %p597 = scmp.lt.s32.totalorder %s30, 2
        %s598 = scalar_select %p597, %s30, 2
        %s599 = scalar_lea.vmem %s5, %s598
        %s600 = smul.u32 16, %s30
        %p601 = scmp.lt.s32.totalorder %s600, 47
        %s602 = scalar_select %p601, %s600, 47
        %s603 = smul.addr %s602, 8
        %s604 = scalar_lea.vmem %s17, %s603
        %s605 = smul.u32 16, %s30
        %p607 = scmp.eq.s32.totalorder %s30, 0
        // Predicated region
        $region81: #{_node_operation_impl.1} parent=79 // pred_check
          %p608 = pneg %p607
        $region82: #{_node_operation_impl.1} parent=79 // pred_check_branch
          %610 = sbr.rel (%p608) target = $region84
        $region83: #{_node_operation_impl.1} parent=79 // pred_region
          %611 = vst [vmem:[#allocation2] sm:$0xff] 0.0
          %612 = vst [vmem:[#allocation2 + $0x8] sm:$0xff] 0.0
          %613 = vst [vmem:[#allocation3] sm:$0xff] 0.0
          %614 = vst [vmem:[#allocation3 + $0x8] sm:$0xff] 0.0
        $region84: #{_node_operation_impl.1} parent=79 // pred_fallthru
          _
        %v615 = vld [vmem:[%s583] sm:$0xff]
        %v616 = vld [vmem:[%s583 + $0x8] sm:$0xff]
        %v617 = vld [vmem:[%s583 + $0x10] sm:$0xff]
        %v618 = vld [vmem:[%s583 + $0x18] sm:$0xff]
        %v619 = vld [vmem:[%s583 + $0x20] sm:$0xff]
        %v620 = vld [vmem:[%s583 + $0x28] sm:$0xff]
        %v621 = vld [vmem:[%s583 + $0x30] sm:$0xff]
        %v622 = vld [vmem:[%s583 + $0x38] sm:$0xff]
        %v623 = vld [vmem:[%s583 + $0x40] sm:$0xff]
        %v624 = vld [vmem:[%s583 + $0x48] sm:$0xff]
        %v625 = vld [vmem:[%s583 + $0x50] sm:$0xff]
        %v626 = vld [vmem:[%s583 + $0x58] sm:$0xff]
        %v627 = vld [vmem:[%s583 + $0x60] sm:$0xff]
        %v628 = vld [vmem:[%s583 + $0x68] sm:$0xff]
        %v629 = vld [vmem:[%s583 + $0x70] sm:$0xff]
        %v630 = vld [vmem:[%s583 + $0x78] sm:$0xff]
        %v631 = vld [vmem:[%s6] sm:$0xff]
        %v632 = vld [vmem:[%s6 + $0x8] sm:$0xff]
        %v633 = vld [vmem:[%s6 + $0x10] sm:$0xff]
        %v634 = vld [vmem:[%s6 + $0x18] sm:$0xff]
        %v635 = vld [vmem:[%s6 + $0x20] sm:$0xff]
        %v636 = vld [vmem:[%s6 + $0x28] sm:$0xff]
        %v637 = vld [vmem:[%s6 + $0x30] sm:$0xff]
        %v638 = vld [vmem:[%s6 + $0x38] sm:$0xff]
        %v639 = vld [vmem:[%s6 + $0x40] sm:$0xff]
        %v640 = vld [vmem:[%s6 + $0x48] sm:$0xff]
        %v641 = vld [vmem:[%s6 + $0x50] sm:$0xff]
        %v642 = vld [vmem:[%s6 + $0x58] sm:$0xff]
        %v643 = vld [vmem:[%s6 + $0x60] sm:$0xff]
        %v644 = vld [vmem:[%s6 + $0x68] sm:$0xff]
        %v645 = vld [vmem:[%s6 + $0x70] sm:$0xff]
        %v646 = vld [vmem:[%s6 + $0x78] sm:$0xff]
        %v647 = vld [vmem:[%s6 + $0x80] sm:$0xff]
        %v648 = vld [vmem:[%s6 + $0x88] sm:$0xff]
        %v649 = vld [vmem:[%s6 + $0x90] sm:$0xff]
        %v650 = vld [vmem:[%s6 + $0x98] sm:$0xff]
        %v651 = vld [vmem:[%s6 + $0xa0] sm:$0xff]
        %v652 = vld [vmem:[%s6 + $0xa8] sm:$0xff]
        %v653 = vld [vmem:[%s6 + $0xb0] sm:$0xff]
        %v654 = vld [vmem:[%s6 + $0xb8] sm:$0xff]
        %v655 = vld [vmem:[%s6 + $0xc0] sm:$0xff]
        %v656 = vld [vmem:[%s6 + $0xc8] sm:$0xff]
        %v657 = vld [vmem:[%s6 + $0xd0] sm:$0xff]
        %v658 = vld [vmem:[%s6 + $0xd8] sm:$0xff]
        %v659 = vld [vmem:[%s6 + $0xe0] sm:$0xff]
        %v660 = vld [vmem:[%s6 + $0xe8] sm:$0xff]
        %v661 = vld [vmem:[%s6 + $0xf0] sm:$0xff]
        %v662 = vld [vmem:[%s6 + $0xf8] sm:$0xff]
        %v663 = vld [vmem:[%s7] sm:$0x3]
        %v665 = vlaneseq
        %v666 = vshrl.u32 %v665, 7
        %v667 = vsub.s32 0, %v666
        %v668 = vrot.slane %v663, %v667
        %v669 = vlaneseq
        %v670 = vshrl.u32 %v669, 7
        %v671 = vsub.s32 1, %v670
        %v672 = vrot.slane %v663, %v671
        %675 = vmatprep.subr.mxu0 %v632
        %676 = vmatpush1.msra.mxu0 %v631
        %677 = vmatprep.subr.mxu0 %v634
        %678 = vmatpush1.msra.mxu0 %v633
        %679 = vmatprep.subr.mxu0 %v636
        %680 = vmatpush1.msra.mxu0 %v635
        %681 = vmatprep.subr.mxu0 %v638
        %682 = vmatpush1.msra.mxu0 %v637
        %683 = vmatprep.subr.mxu0 %v640
        %684 = vmatpush1.msra.mxu0 %v639
        %685 = vmatprep.subr.mxu0 %v642
        %686 = vmatpush1.msra.mxu0 %v641
        %687 = vmatprep.subr.mxu0 %v644
        %688 = vmatpush1.msra.mxu0 %v643
        %689 = vmatprep.subr.mxu0 %v646
        %690 = vmatpush1.msra.mxu0 %v645
        %691 = vmatprep.subr.mxu0 %v648
        %692 = vmatpush1.msra.mxu0 %v647
        %693 = vmatprep.subr.mxu0 %v650
        %694 = vmatpush1.msra.mxu0 %v649
        %695 = vmatprep.subr.mxu0 %v652
        %696 = vmatpush1.msra.mxu0 %v651
        %697 = vmatprep.subr.mxu0 %v654
        %698 = vmatpush1.msra.mxu0 %v653
        %699 = vmatprep.subr.mxu0 %v656
        %700 = vmatpush1.msra.mxu0 %v655
        %701 = vmatprep.subr.mxu0 %v658
        %702 = vmatpush1.msra.mxu0 %v657
        %703 = vmatprep.subr.mxu0 %v660
        %704 = vmatpush1.msra.mxu0 %v659
        %705 = vmatprep.subr.mxu0 %v662
        %706 = vmatpush1.msra.mxu0 %v661
        %707 = vmatprep.subr.mxu0 0.0
        %708 = vmatpush1.msra.mxu0 0.0
        %709 = vmatprep.subr.mxu0 0.0
        %710 = vmatpush1.msra.mxu0 0.0
        %711 = vmatprep.subr.mxu0 0.0
        %712 = vmatpush1.msra.mxu0 0.0
        %713 = vmatprep.subr.mxu0 0.0
        %714 = vmatpush1.msra.mxu0 0.0
        %715 = vmatprep.subr.mxu0 0.0
        %716 = vmatpush1.msra.mxu0 0.0
        %717 = vmatprep.subr.mxu0 0.0
        %718 = vmatpush1.msra.mxu0 0.0
        %719 = vmatprep.subr.mxu0 0.0
        %720 = vmatpush1.msra.mxu0 0.0
        %721 = vmatprep.subr.mxu0 0.0
        %722 = vmatpush1.msra.mxu0 0.0
        %723 = vmatprep.subr.mxu0 0.0
        %724 = vmatpush1.msra.mxu0 0.0
        %725 = vmatprep.subr.mxu0 0.0
        %726 = vmatpush1.msra.mxu0 0.0
        %727 = vmatprep.subr.mxu0 0.0
        %728 = vmatpush1.msra.mxu0 0.0
        %729 = vmatprep.subr.mxu0 0.0
        %730 = vmatpush1.msra.mxu0 0.0
        %731 = vmatprep.subr.mxu0 0.0
        %732 = vmatpush1.msra.mxu0 0.0
        %733 = vmatprep.subr.mxu0 0.0
        %734 = vmatpush1.msra.mxu0 0.0
        %735 = vmatprep.subr.mxu0 0.0
        %736 = vmatpush1.msra.mxu0 0.0
        %737 = vmatprep.subr.mxu0 0.0
        %738 = vmatpush1.msra.mxu0 0.0
        %739 = vmatprep.mubr.f32.mxu0 0.0
        %740 = vmatmul.mubr.f32.gmra.mrb[0].mxu0 %v615
        %v741 = vpop.f32.mrb[0].mxu0
        %v742 = vadd.f32 %v668, %v741
        %v743 = vpop.f32.mrb[0].mxu0
        %v744 = vadd.f32 %v672, %v743
        %745 = vmatprep.mubr.f32.mxu0 0.0
        %746 = vmatmul.mubr.f32.gmra.mrb[0].mxu0 %v616
        %v747 = vpop.f32.mrb[0].mxu0
        %v748 = vadd.f32 %v668, %v747
        %v749 = vpop.f32.mrb[0].mxu0
        %v750 = vadd.f32 %v672, %v749
        %751 = vmatprep.mubr.f32.mxu0 0.0
        %752 = vmatmul.mubr.f32.gmra.mrb[0].mxu0 %v617
        %v753 = vpop.f32.mrb[0].mxu0
        %v754 = vadd.f32 %v668, %v753
        %v755 = vpop.f32.mrb[0].mxu0
        %v756 = vadd.f32 %v672, %v755
        %757 = vmatprep.mubr.f32.mxu0 0.0
        %758 = vmatmul.mubr.f32.gmra.mrb[0].mxu0 %v618
        %v759 = vpop.f32.mrb[0].mxu0
        %v760 = vadd.f32 %v668, %v759
        %v761 = vpop.f32.mrb[0].mxu0
        %v762 = vadd.f32 %v672, %v761
        %763 = vmatprep.mubr.f32.mxu0 0.0
        %764 = vmatmul.mubr.f32.gmra.mrb[0].mxu0 %v619
        %v765 = vpop.f32.mrb[0].mxu0
        %v766 = vadd.f32 %v668, %v765
        %v767 = vpop.f32.mrb[0].mxu0
        %v768 = vadd.f32 %v672, %v767
        %769 = vmatprep.mubr.f32.mxu0 0.0
        %770 = vmatmul.mubr.f32.gmra.mrb[0].mxu0 %v620
        %v771 = vpop.f32.mrb[0].mxu0
        %v772 = vadd.f32 %v668, %v771
        %v773 = vpop.f32.mrb[0].mxu0
        %v774 = vadd.f32 %v672, %v773
        %775 = vmatprep.mubr.f32.mxu0 0.0
        %776 = vmatmul.mubr.f32.gmra.mrb[0].mxu0 %v621
        %v777 = vpop.f32.mrb[0].mxu0
        %v778 = vadd.f32 %v668, %v777
        %v779 = vpop.f32.mrb[0].mxu0
        %v780 = vadd.f32 %v672, %v779
        %781 = vmatprep.mubr.f32.mxu0 0.0
        %782 = vmatmul.mubr.f32.gmra.mrb[0].mxu0 %v622
        %v783 = vpop.f32.mrb[0].mxu0
        %v784 = vadd.f32 %v668, %v783
        %v785 = vpop.f32.mrb[0].mxu0
        %v786 = vadd.f32 %v672, %v785
        %787 = vmatprep.mubr.f32.mxu0 0.0
        %788 = vmatmul.mubr.f32.gmra.mrb[0].mxu0 %v623
        %v789 = vpop.f32.mrb[0].mxu0
        %v790 = vadd.f32 %v668, %v789
        %v791 = vpop.f32.mrb[0].mxu0
        %v792 = vadd.f32 %v672, %v791
        %793 = vmatprep.mubr.f32.mxu0 0.0
        %794 = vmatmul.mubr.f32.gmra.mrb[0].mxu0 %v624
        %v795 = vpop.f32.mrb[0].mxu0
        %v796 = vadd.f32 %v668, %v795
        %v797 = vpop.f32.mrb[0].mxu0
        %v798 = vadd.f32 %v672, %v797
        %799 = vmatprep.mubr.f32.mxu0 0.0
        %800 = vmatmul.mubr.f32.gmra.mrb[0].mxu0 %v625
        %v801 = vpop.f32.mrb[0].mxu0
        %v802 = vadd.f32 %v668, %v801
        %v803 = vpop.f32.mrb[0].mxu0
        %v804 = vadd.f32 %v672, %v803
        %805 = vmatprep.mubr.f32.mxu0 0.0
        %806 = vmatmul.mubr.f32.gmra.mrb[0].mxu0 %v626
        %v807 = vpop.f32.mrb[0].mxu0
        %v808 = vadd.f32 %v668, %v807
        %v809 = vpop.f32.mrb[0].mxu0
        %v810 = vadd.f32 %v672, %v809
        %811 = vmatprep.mubr.f32.mxu0 0.0
        %812 = vmatmul.mubr.f32.gmra.mrb[0].mxu0 %v627
        %v813 = vpop.f32.mrb[0].mxu0
        %v814 = vadd.f32 %v668, %v813
        %v815 = vpop.f32.mrb[0].mxu0
        %v816 = vadd.f32 %v672, %v815
        %817 = vmatprep.mubr.f32.mxu0 0.0
        %818 = vmatmul.mubr.f32.gmra.mrb[0].mxu0 %v628
        %v819 = vpop.f32.mrb[0].mxu0
        %v820 = vadd.f32 %v668, %v819
        %v821 = vpop.f32.mrb[0].mxu0
        %v822 = vadd.f32 %v672, %v821
        %823 = vmatprep.mubr.f32.mxu0 0.0
        %824 = vmatmul.mubr.f32.gmra.mrb[0].mxu0 %v629
        %v825 = vpop.f32.mrb[0].mxu0
        %v826 = vadd.f32 %v668, %v825
        %v827 = vpop.f32.mrb[0].mxu0
        %v828 = vadd.f32 %v672, %v827
        %829 = vmatprep.mubr.f32.mxu0 0.0
        %830 = vmatmul.mubr.f32.gmra.mrb[0].mxu0 %v630
        %v831 = vpop.f32.mrb[0].mxu0
        %v832 = vadd.f32 %v668, %v831
        %v833 = vpop.f32.mrb[0].mxu0
        %v834 = vadd.f32 %v672, %v833
        %835 = vdwg.mxu0
        %v836 = vxor.u32 %v742, 2147483648
        %v837 = vxor.u32 %v744, 2147483648
        %v838 = vxor.u32 %v748, 2147483648
        %v839 = vxor.u32 %v750, 2147483648
        %v840 = vxor.u32 %v754, 2147483648
        %v841 = vxor.u32 %v756, 2147483648
        %v842 = vxor.u32 %v760, 2147483648
        %v843 = vxor.u32 %v762, 2147483648
        %v844 = vxor.u32 %v766, 2147483648
        %v845 = vxor.u32 %v768, 2147483648
        %v846 = vxor.u32 %v772, 2147483648
        %v847 = vxor.u32 %v774, 2147483648
        %v848 = vxor.u32 %v778, 2147483648
        %v849 = vxor.u32 %v780, 2147483648
        %v850 = vxor.u32 %v784, 2147483648
        %v851 = vxor.u32 %v786, 2147483648
        %v852 = vxor.u32 %v790, 2147483648
        %v853 = vxor.u32 %v792, 2147483648
        %v854 = vxor.u32 %v796, 2147483648
        %v855 = vxor.u32 %v798, 2147483648
        %v856 = vxor.u32 %v802, 2147483648
        %v857 = vxor.u32 %v804, 2147483648
        %v858 = vxor.u32 %v808, 2147483648
        %v859 = vxor.u32 %v810, 2147483648
        %v860 = vxor.u32 %v814, 2147483648
        %v861 = vxor.u32 %v816, 2147483648
        %v862 = vxor.u32 %v820, 2147483648
        %v863 = vxor.u32 %v822, 2147483648
        %v864 = vxor.u32 %v826, 2147483648
        %v865 = vxor.u32 %v828, 2147483648
        %v866 = vxor.u32 %v832, 2147483648
        %v867 = vxor.u32 %v834, 2147483648
        %v868 = vmul.f32 %v836, 1.442695
        %v869 = vpow.pop %v868
        %v870 = vmul.f32 %v837, 1.442695
        %v871 = vpow.pop %v870
        %v872 = vmul.f32 %v838, 1.442695
        %v873 = vpow.pop %v872
        %v874 = vmul.f32 %v839, 1.442695
        %v875 = vpow.pop %v874
        %v876 = vmul.f32 %v840, 1.442695
        %v877 = vpow.pop %v876
        %v878 = vmul.f32 %v841, 1.442695
        %v879 = vpow.pop %v878
        %v880 = vmul.f32 %v842, 1.442695
        %v881 = vpow.pop %v880
        %v882 = vmul.f32 %v843, 1.442695
        %v883 = vpow.pop %v882
        %v884 = vmul.f32 %v844, 1.442695
        %v885 = vpow.pop %v884
        %v886 = vmul.f32 %v845, 1.442695
        %v887 = vpow.pop %v886
        %v888 = vmul.f32 %v846, 1.442695
        %v889 = vpow.pop %v888
        %v890 = vmul.f32 %v847, 1.442695
        %v891 = vpow.pop %v890
        %v892 = vmul.f32 %v848, 1.442695
        %v893 = vpow.pop %v892
        %v894 = vmul.f32 %v849, 1.442695
        %v895 = vpow.pop %v894
        %v896 = vmul.f32 %v850, 1.442695
        %v897 = vpow.pop %v896
        %v898 = vmul.f32 %v851, 1.442695
        %v899 = vpow.pop %v898
        %v900 = vmul.f32 %v852, 1.442695
        %v901 = vpow.pop %v900
        %v902 = vmul.f32 %v853, 1.442695
        %v903 = vpow.pop %v902
        %v904 = vmul.f32 %v854, 1.442695
        %v905 = vpow.pop %v904
        %v906 = vmul.f32 %v855, 1.442695
        %v907 = vpow.pop %v906
        %v908 = vmul.f32 %v856, 1.442695
        %v909 = vpow.pop %v908
        %v910 = vmul.f32 %v857, 1.442695
        %v911 = vpow.pop %v910
        %v912 = vmul.f32 %v858, 1.442695
        %v913 = vpow.pop %v912
        %v914 = vmul.f32 %v859, 1.442695
        %v915 = vpow.pop %v914
        %v916 = vmul.f32 %v860, 1.442695
        %v917 = vpow.pop %v916
        %v918 = vmul.f32 %v861, 1.442695
        %v919 = vpow.pop %v918
        %v920 = vmul.f32 %v862, 1.442695
        %v921 = vpow.pop %v920
        %v922 = vmul.f32 %v863, 1.442695
        %v923 = vpow.pop %v922
        %v924 = vmul.f32 %v864, 1.442695
        %v925 = vpow.pop %v924
        %v926 = vmul.f32 %v865, 1.442695
        %v927 = vpow.pop %v926
        %v928 = vmul.f32 %v866, 1.442695
        %v929 = vpow.pop %v928
        %v930 = vmul.f32 %v867, 1.442695
        %v931 = vpow.pop %v930
        %v932 = vadd.f32 %v869, 1.0
        %v933 = vadd.f32 %v871, 1.0
        %v934 = vadd.f32 %v873, 1.0
        %v935 = vadd.f32 %v875, 1.0
        %v936 = vadd.f32 %v877, 1.0
        %v937 = vadd.f32 %v879, 1.0
        %v938 = vadd.f32 %v881, 1.0
        %v939 = vadd.f32 %v883, 1.0
        %v940 = vadd.f32 %v885, 1.0
        %v941 = vadd.f32 %v887, 1.0
        %v942 = vadd.f32 %v889, 1.0
        %v943 = vadd.f32 %v891, 1.0
        %v944 = vadd.f32 %v893, 1.0
        %v945 = vadd.f32 %v895, 1.0
        %v946 = vadd.f32 %v897, 1.0
        %v947 = vadd.f32 %v899, 1.0
        %v948 = vadd.f32 %v901, 1.0
        %v949 = vadd.f32 %v903, 1.0
        %v950 = vadd.f32 %v905, 1.0
        %v951 = vadd.f32 %v907, 1.0
        %v952 = vadd.f32 %v909, 1.0
        %v953 = vadd.f32 %v911, 1.0
        %v954 = vadd.f32 %v913, 1.0
        %v955 = vadd.f32 %v915, 1.0
        %v956 = vadd.f32 %v917, 1.0
        %v957 = vadd.f32 %v919, 1.0
        %v958 = vadd.f32 %v921, 1.0
        %v959 = vadd.f32 %v923, 1.0
        %v960 = vadd.f32 %v925, 1.0
        %v961 = vadd.f32 %v927, 1.0
        %v962 = vadd.f32 %v929, 1.0
        %v963 = vadd.f32 %v931, 1.0
        %v964 = vrcp.pop %v932
        %v965 = vmul.f32 1.0, %v964
        %v966 = vrcp.pop %v933
        %v967 = vmul.f32 1.0, %v966
        %v968 = vrcp.pop %v934
        %v969 = vmul.f32 1.0, %v968
        %v970 = vrcp.pop %v935
        %v971 = vmul.f32 1.0, %v970
        %v972 = vrcp.pop %v936
        %v973 = vmul.f32 1.0, %v972
        %v974 = vrcp.pop %v937
        %v975 = vmul.f32 1.0, %v974
        %v976 = vrcp.pop %v938
        %v977 = vmul.f32 1.0, %v976
        %v978 = vrcp.pop %v939
        %v979 = vmul.f32 1.0, %v978
        %v980 = vrcp.pop %v940
        %v981 = vmul.f32 1.0, %v980
        %v982 = vrcp.pop %v941
        %v983 = vmul.f32 1.0, %v982
        %v984 = vrcp.pop %v942
        %v985 = vmul.f32 1.0, %v984
        %v986 = vrcp.pop %v943
        %v987 = vmul.f32 1.0, %v986
        %v988 = vrcp.pop %v944
        %v989 = vmul.f32 1.0, %v988
        %v990 = vrcp.pop %v945
        %v991 = vmul.f32 1.0, %v990
        %v992 = vrcp.pop %v946
        %v993 = vmul.f32 1.0, %v992
        %v994 = vrcp.pop %v947
        %v995 = vmul.f32 1.0, %v994
        %v996 = vrcp.pop %v948
        %v997 = vmul.f32 1.0, %v996
        %v998 = vrcp.pop %v949
        %v999 = vmul.f32 1.0, %v998
        %v1000 = vrcp.pop %v950
        %v1001 = vmul.f32 1.0, %v1000
        %v1002 = vrcp.pop %v951
        %v1003 = vmul.f32 1.0, %v1002
        %v1004 = vrcp.pop %v952
        %v1005 = vmul.f32 1.0, %v1004
        %v1006 = vrcp.pop %v953
        %v1007 = vmul.f32 1.0, %v1006
        %v1008 = vrcp.pop %v954
        %v1009 = vmul.f32 1.0, %v1008
        %v1010 = vrcp.pop %v955
        %v1011 = vmul.f32 1.0, %v1010
        %v1012 = vrcp.pop %v956
        %v1013 = vmul.f32 1.0, %v1012
        %v1014 = vrcp.pop %v957
        %v1015 = vmul.f32 1.0, %v1014
        %v1016 = vrcp.pop %v958
        %v1017 = vmul.f32 1.0, %v1016
        %v1018 = vrcp.pop %v959
        %v1019 = vmul.f32 1.0, %v1018
        %v1020 = vrcp.pop %v960
        %v1021 = vmul.f32 1.0, %v1020
        %v1022 = vrcp.pop %v961
        %v1023 = vmul.f32 1.0, %v1022
        %v1024 = vrcp.pop %v962
        %v1025 = vmul.f32 1.0, %v1024
        %v1026 = vrcp.pop %v963
        %v1027 = vmul.f32 1.0, %v1026
        %v1028 = vmul.f32 %v742, %v965
        %v1029 = vmul.f32 %v744, %v967
        %v1030 = vmul.f32 %v748, %v969
        %v1031 = vmul.f32 %v750, %v971
        %v1032 = vmul.f32 %v754, %v973
        %v1033 = vmul.f32 %v756, %v975
        %v1034 = vmul.f32 %v760, %v977
        %v1035 = vmul.f32 %v762, %v979
        %v1036 = vmul.f32 %v766, %v981
        %v1037 = vmul.f32 %v768, %v983
        %v1038 = vmul.f32 %v772, %v985
        %v1039 = vmul.f32 %v774, %v987
        %v1040 = vmul.f32 %v778, %v989
        %v1041 = vmul.f32 %v780, %v991
        %v1042 = vmul.f32 %v784, %v993
        %v1043 = vmul.f32 %v786, %v995
        %v1044 = vmul.f32 %v790, %v997
        %v1045 = vmul.f32 %v792, %v999
        %v1046 = vmul.f32 %v796, %v1001
        %v1047 = vmul.f32 %v798, %v1003
        %v1048 = vmul.f32 %v802, %v1005
        %v1049 = vmul.f32 %v804, %v1007
        %v1050 = vmul.f32 %v808, %v1009
        %v1051 = vmul.f32 %v810, %v1011
        %v1052 = vmul.f32 %v814, %v1013
        %v1053 = vmul.f32 %v816, %v1015
        %v1054 = vmul.f32 %v820, %v1017
        %v1055 = vmul.f32 %v822, %v1019
        %v1056 = vmul.f32 %v826, %v1021
        %v1057 = vmul.f32 %v828, %v1023
        %v1058 = vmul.f32 %v832, %v1025
        %v1059 = vmul.f32 %v834, %v1027
        %v1060 = vld [vmem:[%s8] sm:$0xff]
        %v1061 = vld [vmem:[%s8 + $0x8] sm:$0xff]
        %v1062 = vld [vmem:[%s8 + $0x10] sm:$0xff]
        %v1063 = vld [vmem:[%s8 + $0x18] sm:$0xff]
        %v1064 = vld [vmem:[%s8 + $0x20] sm:$0xff]
        %v1065 = vld [vmem:[%s8 + $0x28] sm:$0xff]
        %v1066 = vld [vmem:[%s8 + $0x30] sm:$0xff]
        %v1067 = vld [vmem:[%s8 + $0x38] sm:$0xff]
        %v1068 = vld [vmem:[%s8 + $0x40] sm:$0xff]
        %v1069 = vld [vmem:[%s8 + $0x48] sm:$0xff]
        %v1070 = vld [vmem:[%s8 + $0x50] sm:$0xff]
        %v1071 = vld [vmem:[%s8 + $0x58] sm:$0xff]
        %v1072 = vld [vmem:[%s8 + $0x60] sm:$0xff]
        %v1073 = vld [vmem:[%s8 + $0x68] sm:$0xff]
        %v1074 = vld [vmem:[%s8 + $0x70] sm:$0xff]
        %v1075 = vld [vmem:[%s8 + $0x78] sm:$0xff]
        %v1076 = vld [vmem:[%s8 + $0x80] sm:$0xff]
        %v1077 = vld [vmem:[%s8 + $0x88] sm:$0xff]
        %v1078 = vld [vmem:[%s8 + $0x90] sm:$0xff]
        %v1079 = vld [vmem:[%s8 + $0x98] sm:$0xff]
        %v1080 = vld [vmem:[%s8 + $0xa0] sm:$0xff]
        %v1081 = vld [vmem:[%s8 + $0xa8] sm:$0xff]
        %v1082 = vld [vmem:[%s8 + $0xb0] sm:$0xff]
        %v1083 = vld [vmem:[%s8 + $0xb8] sm:$0xff]
        %v1084 = vld [vmem:[%s8 + $0xc0] sm:$0xff]
        %v1085 = vld [vmem:[%s8 + $0xc8] sm:$0xff]
        %v1086 = vld [vmem:[%s8 + $0xd0] sm:$0xff]
        %v1087 = vld [vmem:[%s8 + $0xd8] sm:$0xff]
        %v1088 = vld [vmem:[%s8 + $0xe0] sm:$0xff]
        %v1089 = vld [vmem:[%s8 + $0xe8] sm:$0xff]
        %v1090 = vld [vmem:[%s8 + $0xf0] sm:$0xff]
        %v1091 = vld [vmem:[%s8 + $0xf8] sm:$0xff]
        %v1092 = vld [vmem:[%s9] sm:$0x1]
        %v1094 = vlaneseq
        %v1095 = vshrl.u32 %v1094, 7
        %v1096 = vsub.s32 0, %v1095
        %v1097 = vrot.slane %v1092, %v1096
        %1099 = vmatprep.subr.mxu0 0.0
        %1100 = vmatpush1.msra.mxu0 %v1060
        %1101 = vmatprep.subr.mxu0 0.0
        %1102 = vmatpush1.msra.mxu0 %v1061
        %1103 = vmatprep.subr.mxu0 0.0
        %1104 = vmatpush1.msra.mxu0 %v1062
        %1105 = vmatprep.subr.mxu0 0.0
        %1106 = vmatpush1.msra.mxu0 %v1063
        %1107 = vmatprep.subr.mxu0 0.0
        %1108 = vmatpush1.msra.mxu0 %v1064
        %1109 = vmatprep.subr.mxu0 0.0
        %1110 = vmatpush1.msra.mxu0 %v1065
        %1111 = vmatprep.subr.mxu0 0.0
        %1112 = vmatpush1.msra.mxu0 %v1066
        %1113 = vmatprep.subr.mxu0 0.0
        %1114 = vmatpush1.msra.mxu0 %v1067
        %1115 = vmatprep.subr.mxu0 0.0
        %1116 = vmatpush1.msra.mxu0 %v1068
        %1117 = vmatprep.subr.mxu0 0.0
        %1118 = vmatpush1.msra.mxu0 %v1069
        %1119 = vmatprep.subr.mxu0 0.0
        %1120 = vmatpush1.msra.mxu0 %v1070
        %1121 = vmatprep.subr.mxu0 0.0
        %1122 = vmatpush1.msra.mxu0 %v1071
        %1123 = vmatprep.subr.mxu0 0.0
        %1124 = vmatpush1.msra.mxu0 %v1072
        %1125 = vmatprep.subr.mxu0 0.0
        %1126 = vmatpush1.msra.mxu0 %v1073
        %1127 = vmatprep.subr.mxu0 0.0
        %1128 = vmatpush1.msra.mxu0 %v1074
        %1129 = vmatprep.subr.mxu0 0.0
        %1130 = vmatpush1.msra.mxu0 %v1075
        %1131 = vmatprep.subr.mxu0 0.0
        %1132 = vmatpush1.msra.mxu0 %v1076
        %1133 = vmatprep.subr.mxu0 0.0
        %1134 = vmatpush1.msra.mxu0 %v1077
        %1135 = vmatprep.subr.mxu0 0.0
        %1136 = vmatpush1.msra.mxu0 %v1078
        %1137 = vmatprep.subr.mxu0 0.0
        %1138 = vmatpush1.msra.mxu0 %v1079
        %1139 = vmatprep.subr.mxu0 0.0
        %1140 = vmatpush1.msra.mxu0 %v1080
        %1141 = vmatprep.subr.mxu0 0.0
        %1142 = vmatpush1.msra.mxu0 %v1081
        %1143 = vmatprep.subr.mxu0 0.0
        %1144 = vmatpush1.msra.mxu0 %v1082
        %1145 = vmatprep.subr.mxu0 0.0
        %1146 = vmatpush1.msra.mxu0 %v1083
        %1147 = vmatprep.subr.mxu0 0.0
        %1148 = vmatpush1.msra.mxu0 %v1084
        %1149 = vmatprep.subr.mxu0 0.0
        %1150 = vmatpush1.msra.mxu0 %v1085
        %1151 = vmatprep.subr.mxu0 0.0
        %1152 = vmatpush1.msra.mxu0 %v1086
        %1153 = vmatprep.subr.mxu0 0.0
        %1154 = vmatpush1.msra.mxu0 %v1087
        %1155 = vmatprep.subr.mxu0 0.0
        %1156 = vmatpush1.msra.mxu0 %v1088
        %1157 = vmatprep.subr.mxu0 0.0
        %1158 = vmatpush1.msra.mxu0 %v1089
        %1159 = vmatprep.subr.mxu0 0.0
        %1160 = vmatpush1.msra.mxu0 %v1090
        %1161 = vmatprep.subr.mxu0 0.0
        %1162 = vmatpush1.msra.mxu0 %v1091
        %1163 = vmatprep.mubr.f32.mxu0 %v1029
        %1164 = vmatmul.mubr.f32.gmra.mrb[0].mxu0 %v1028
        %v1165 = vpop.f32.mrb[0].mxu0
        %v1166 = vadd.f32 %v1097, %v1165
        %v1167 = vpop.f32.mrb[0].mxu0
        %1168 = vmatprep.mubr.f32.mxu0 %v1031
        %1169 = vmatmul.mubr.f32.gmra.mrb[0].mxu0 %v1030
        %v1170 = vpop.f32.mrb[0].mxu0
        %v1171 = vadd.f32 %v1097, %v1170
        %v1172 = vpop.f32.mrb[0].mxu0
        %1173 = vmatprep.mubr.f32.mxu0 %v1033
        %1174 = vmatmul.mubr.f32.gmra.mrb[0].mxu0 %v1032
        %v1175 = vpop.f32.mrb[0].mxu0
        %v1176 = vadd.f32 %v1097, %v1175
        %v1177 = vpop.f32.mrb[0].mxu0
        %1178 = vmatprep.mubr.f32.mxu0 %v1035
        %1179 = vmatmul.mubr.f32.gmra.mrb[0].mxu0 %v1034
        %v1180 = vpop.f32.mrb[0].mxu0
        %v1181 = vadd.f32 %v1097, %v1180
        %v1182 = vpop.f32.mrb[0].mxu0
        %1183 = vmatprep.mubr.f32.mxu0 %v1037
        %1184 = vmatmul.mubr.f32.gmra.mrb[0].mxu0 %v1036
        %v1185 = vpop.f32.mrb[0].mxu0
        %v1186 = vadd.f32 %v1097, %v1185
        %v1187 = vpop.f32.mrb[0].mxu0
        %1188 = vmatprep.mubr.f32.mxu0 %v1039
        %1189 = vmatmul.mubr.f32.gmra.mrb[0].mxu0 %v1038
        %v1190 = vpop.f32.mrb[0].mxu0
        %v1191 = vadd.f32 %v1097, %v1190
        %v1192 = vpop.f32.mrb[0].mxu0
        %1193 = vmatprep.mubr.f32.mxu0 %v1041
        %1194 = vmatmul.mubr.f32.gmra.mrb[0].mxu0 %v1040
        %v1195 = vpop.f32.mrb[0].mxu0
        %v1196 = vadd.f32 %v1097, %v1195
        %v1197 = vpop.f32.mrb[0].mxu0
        %1198 = vmatprep.mubr.f32.mxu0 %v1043
        %1199 = vmatmul.mubr.f32.gmra.mrb[0].mxu0 %v1042
        %v1200 = vpop.f32.mrb[0].mxu0
        %v1201 = vadd.f32 %v1097, %v1200
        %v1202 = vpop.f32.mrb[0].mxu0
        %1203 = vmatprep.mubr.f32.mxu0 %v1045
        %1204 = vmatmul.mubr.f32.gmra.mrb[0].mxu0 %v1044
        %v1205 = vpop.f32.mrb[0].mxu0
        %v1206 = vadd.f32 %v1097, %v1205
        %v1207 = vpop.f32.mrb[0].mxu0
        %1208 = vmatprep.mubr.f32.mxu0 %v1047
        %1209 = vmatmul.mubr.f32.gmra.mrb[0].mxu0 %v1046
        %v1210 = vpop.f32.mrb[0].mxu0
        %v1211 = vadd.f32 %v1097, %v1210
        %v1212 = vpop.f32.mrb[0].mxu0
        %1213 = vmatprep.mubr.f32.mxu0 %v1049
        %1214 = vmatmul.mubr.f32.gmra.mrb[0].mxu0 %v1048
        %v1215 = vpop.f32.mrb[0].mxu0
        %v1216 = vadd.f32 %v1097, %v1215
        %v1217 = vpop.f32.mrb[0].mxu0
        %1218 = vmatprep.mubr.f32.mxu0 %v1051
        %1219 = vmatmul.mubr.f32.gmra.mrb[0].mxu0 %v1050
        %v1220 = vpop.f32.mrb[0].mxu0
        %v1221 = vadd.f32 %v1097, %v1220
        %v1222 = vpop.f32.mrb[0].mxu0
        %1223 = vmatprep.mubr.f32.mxu0 %v1053
        %1224 = vmatmul.mubr.f32.gmra.mrb[0].mxu0 %v1052
        %v1225 = vpop.f32.mrb[0].mxu0
        %v1226 = vadd.f32 %v1097, %v1225
        %v1227 = vpop.f32.mrb[0].mxu0
        %1228 = vmatprep.mubr.f32.mxu0 %v1055
        %1229 = vmatmul.mubr.f32.gmra.mrb[0].mxu0 %v1054
        %v1230 = vpop.f32.mrb[0].mxu0
        %v1231 = vadd.f32 %v1097, %v1230
        %v1232 = vpop.f32.mrb[0].mxu0
        %1233 = vmatprep.mubr.f32.mxu0 %v1057
        %1234 = vmatmul.mubr.f32.gmra.mrb[0].mxu0 %v1056
        %v1235 = vpop.f32.mrb[0].mxu0
        %v1236 = vadd.f32 %v1097, %v1235
        %v1237 = vpop.f32.mrb[0].mxu0
        %1238 = vmatprep.mubr.f32.mxu0 %v1059
        %1239 = vmatmul.mubr.f32.gmra.mrb[0].mxu0 %v1058
        %v1240 = vpop.f32.mrb[0].mxu0
        %v1241 = vadd.f32 %v1097, %v1240
        %v1242 = vpop.f32.mrb[0].mxu0
        %1243 = vdwg.mxu0
        %v1244 = vxor.u32 %v1166, 2147483648
        %v1245 = vxor.u32 %v1171, 2147483648
        %v1246 = vxor.u32 %v1176, 2147483648
        %v1247 = vxor.u32 %v1181, 2147483648
        %v1248 = vxor.u32 %v1186, 2147483648
        %v1249 = vxor.u32 %v1191, 2147483648
        %v1250 = vxor.u32 %v1196, 2147483648
        %v1251 = vxor.u32 %v1201, 2147483648
        %v1252 = vxor.u32 %v1206, 2147483648
        %v1253 = vxor.u32 %v1211, 2147483648
        %v1254 = vxor.u32 %v1216, 2147483648
        %v1255 = vxor.u32 %v1221, 2147483648
        %v1256 = vxor.u32 %v1226, 2147483648
        %v1257 = vxor.u32 %v1231, 2147483648
        %v1258 = vxor.u32 %v1236, 2147483648
        %v1259 = vxor.u32 %v1241, 2147483648
        %v1260 = vmul.f32 %v1244, 1.442695
        %v1261 = vpow.pop %v1260
        %v1262 = vmul.f32 %v1245, 1.442695
        %v1263 = vpow.pop %v1262
        %v1264 = vmul.f32 %v1246, 1.442695
        %v1265 = vpow.pop %v1264
        %v1266 = vmul.f32 %v1247, 1.442695
        %v1267 = vpow.pop %v1266
        %v1268 = vmul.f32 %v1248, 1.442695
        %v1269 = vpow.pop %v1268
        %v1270 = vmul.f32 %v1249, 1.442695
        %v1271 = vpow.pop %v1270
        %v1272 = vmul.f32 %v1250, 1.442695
        %v1273 = vpow.pop %v1272
        %v1274 = vmul.f32 %v1251, 1.442695
        %v1275 = vpow.pop %v1274
        %v1276 = vmul.f32 %v1252, 1.442695
        %v1277 = vpow.pop %v1276
        %v1278 = vmul.f32 %v1253, 1.442695
        %v1279 = vpow.pop %v1278
        %v1280 = vmul.f32 %v1254, 1.442695
        %v1281 = vpow.pop %v1280
        %v1282 = vmul.f32 %v1255, 1.442695
        %v1283 = vpow.pop %v1282
        %v1284 = vmul.f32 %v1256, 1.442695
        %v1285 = vpow.pop %v1284
        %v1286 = vmul.f32 %v1257, 1.442695
        %v1287 = vpow.pop %v1286
        %v1288 = vmul.f32 %v1258, 1.442695
        %v1289 = vpow.pop %v1288
        %v1290 = vmul.f32 %v1259, 1.442695
        %v1291 = vpow.pop %v1290
        %v1292 = vadd.f32 %v1261, 1.0
        %v1293 = vadd.f32 %v1263, 1.0
        %v1294 = vadd.f32 %v1265, 1.0
        %v1295 = vadd.f32 %v1267, 1.0
        %v1296 = vadd.f32 %v1269, 1.0
        %v1297 = vadd.f32 %v1271, 1.0
        %v1298 = vadd.f32 %v1273, 1.0
        %v1299 = vadd.f32 %v1275, 1.0
        %v1300 = vadd.f32 %v1277, 1.0
        %v1301 = vadd.f32 %v1279, 1.0
        %v1302 = vadd.f32 %v1281, 1.0
        %v1303 = vadd.f32 %v1283, 1.0
        %v1304 = vadd.f32 %v1285, 1.0
        %v1305 = vadd.f32 %v1287, 1.0
        %v1306 = vadd.f32 %v1289, 1.0
        %v1307 = vadd.f32 %v1291, 1.0
        %v1308 = vrcp.pop %v1292
        %v1309 = vmul.f32 1.0, %v1308
        %v1310 = vrcp.pop %v1293
        %v1311 = vmul.f32 1.0, %v1310
        %v1312 = vrcp.pop %v1294
        %v1313 = vmul.f32 1.0, %v1312
        %v1314 = vrcp.pop %v1295
        %v1315 = vmul.f32 1.0, %v1314
        %v1316 = vrcp.pop %v1296
        %v1317 = vmul.f32 1.0, %v1316
        %v1318 = vrcp.pop %v1297
        %v1319 = vmul.f32 1.0, %v1318
        %v1320 = vrcp.pop %v1298
        %v1321 = vmul.f32 1.0, %v1320
        %v1322 = vrcp.pop %v1299
        %v1323 = vmul.f32 1.0, %v1322
        %v1324 = vrcp.pop %v1300
        %v1325 = vmul.f32 1.0, %v1324
        %v1326 = vrcp.pop %v1301
        %v1327 = vmul.f32 1.0, %v1326
        %v1328 = vrcp.pop %v1302
        %v1329 = vmul.f32 1.0, %v1328
        %v1330 = vrcp.pop %v1303
        %v1331 = vmul.f32 1.0, %v1330
        %v1332 = vrcp.pop %v1304
        %v1333 = vmul.f32 1.0, %v1332
        %v1334 = vrcp.pop %v1305
        %v1335 = vmul.f32 1.0, %v1334
        %v1336 = vrcp.pop %v1306
        %v1337 = vmul.f32 1.0, %v1336
        %v1338 = vrcp.pop %v1307
        %v1339 = vmul.f32 1.0, %v1338
        %vm1340 = vcmask 7168
        %1341 = vst.msk [vmem:[%s604] sm:$0xff] %vm1340, %v1309
        %1342 = vst.msk [vmem:[%s604 + $0x8] sm:$0xff] %vm1340, %v1311
        %1343 = vst.msk [vmem:[%s604 + $0x10] sm:$0xff] %vm1340, %v1313
        %1344 = vst.msk [vmem:[%s604 + $0x18] sm:$0xff] %vm1340, %v1315
        %1345 = vst.msk [vmem:[%s604 + $0x20] sm:$0xff] %vm1340, %v1317
        %1346 = vst.msk [vmem:[%s604 + $0x28] sm:$0xff] %vm1340, %v1319
        %1347 = vst.msk [vmem:[%s604 + $0x30] sm:$0xff] %vm1340, %v1321
        %1348 = vst.msk [vmem:[%s604 + $0x38] sm:$0xff] %vm1340, %v1323
        %1349 = vst.msk [vmem:[%s604 + $0x40] sm:$0xff] %vm1340, %v1325
        %1350 = vst.msk [vmem:[%s604 + $0x48] sm:$0xff] %vm1340, %v1327
        %1351 = vst.msk [vmem:[%s604 + $0x50] sm:$0xff] %vm1340, %v1329
        %1352 = vst.msk [vmem:[%s604 + $0x58] sm:$0xff] %vm1340, %v1331
        %1353 = vst.msk [vmem:[%s604 + $0x60] sm:$0xff] %vm1340, %v1333
        %1354 = vst.msk [vmem:[%s604 + $0x68] sm:$0xff] %vm1340, %v1335
        %1355 = vst.msk [vmem:[%s604 + $0x70] sm:$0xff] %vm1340, %v1337
        %1356 = vst.msk [vmem:[%s604 + $0x78] sm:$0xff] %vm1340, %v1339
        %v1357 = vld [vmem:[%s599] sm:$0x1]
        %v1358 = vlaneseq
        %v1359 = vshrl.u32 %v1358, 7
        %v1360 = vadd.s32 %v1359, 8
        %v1361 = vlaneseq
        %v1362 = vshrl.u32 %v1361, 7
        %v1363 = vsub.s32 0, %v1362
        %v1364 = vrot.slane %v1357, %v1363
        %vm1365 = vcmp.eq.s32.totalorder %v1359, %v1364
        %vm1366 = vcmp.eq.s32.totalorder %v1360, %v1364
        %v1367 = vsel %vm1365, 1, 0
        %v1368 = vsel %vm1366, 1, 0
        %v1369 = vcvt.s32.f32 %v1367
        %v1370 = vcvt.s32.f32 %v1368
        %v1371 = vpack.c.bf16 %v1370, %v1369
        %1373 = vset.pattern.permute.xlu0 0
        %1374 = vperm.xlu0 %1373, %v1309
        %v1375 = vpop.permute.xlu0 %1374
        %1378 = vset.pattern.permute.xlu0 0
        %1379 = vperm.xlu0 %1378, %v1311
        %v1380 = vpop.permute.xlu0 %1379
        %1383 = vset.pattern.permute.xlu0 0
        %1384 = vperm.xlu0 %1383, %v1313
        %v1385 = vpop.permute.xlu0 %1384
        %1388 = vset.pattern.permute.xlu0 0
        %1389 = vperm.xlu0 %1388, %v1315
        %v1390 = vpop.permute.xlu0 %1389
        %1393 = vset.pattern.permute.xlu0 0
        %1394 = vperm.xlu0 %1393, %v1317
        %v1395 = vpop.permute.xlu0 %1394
        %1398 = vset.pattern.permute.xlu0 0
        %1399 = vperm.xlu0 %1398, %v1319
        %v1400 = vpop.permute.xlu0 %1399
        %1403 = vset.pattern.permute.xlu0 0
        %1404 = vperm.xlu0 %1403, %v1321
        %v1405 = vpop.permute.xlu0 %1404
        %1408 = vset.pattern.permute.xlu0 0
        %1409 = vperm.xlu0 %1408, %v1323
        %v1410 = vpop.permute.xlu0 %1409
        %1413 = vset.pattern.permute.xlu0 0
        %1414 = vperm.xlu0 %1413, %v1325
        %v1415 = vpop.permute.xlu0 %1414
        %1418 = vset.pattern.permute.xlu0 0
        %1419 = vperm.xlu0 %1418, %v1327
        %v1420 = vpop.permute.xlu0 %1419
        %1423 = vset.pattern.permute.xlu0 0
        %1424 = vperm.xlu0 %1423, %v1329
        %v1425 = vpop.permute.xlu0 %1424
        %1428 = vset.pattern.permute.xlu0 0
        %1429 = vperm.xlu0 %1428, %v1331
        %v1430 = vpop.permute.xlu0 %1429
        %1433 = vset.pattern.permute.xlu0 0
        %1434 = vperm.xlu0 %1433, %v1333
        %v1435 = vpop.permute.xlu0 %1434
        %1438 = vset.pattern.permute.xlu0 0
        %1439 = vperm.xlu0 %1438, %v1335
        %v1440 = vpop.permute.xlu0 %1439
        %1443 = vset.pattern.permute.xlu0 0
        %1444 = vperm.xlu0 %1443, %v1337
        %v1445 = vpop.permute.xlu0 %1444
        %1448 = vset.pattern.permute.xlu0 0
        %1449 = vperm.xlu0 %1448, %v1339
        %v1450 = vpop.permute.xlu0 %1449
        %v1452 = vmul.f32 %v615, %v1375
        %v1453 = vmul.f32 %v616, %v1380
        %v1454 = vmul.f32 %v617, %v1385
        %v1455 = vmul.f32 %v618, %v1390
        %v1456 = vmul.f32 %v619, %v1395
        %v1457 = vmul.f32 %v620, %v1400
        %v1458 = vmul.f32 %v621, %v1405
        %v1459 = vmul.f32 %v622, %v1410
        %v1460 = vmul.f32 %v623, %v1415
        %v1461 = vmul.f32 %v624, %v1420
        %v1462 = vmul.f32 %v625, %v1425
        %v1463 = vmul.f32 %v626, %v1430
        %v1464 = vmul.f32 %v627, %v1435
        %v1465 = vmul.f32 %v628, %v1440
        %v1466 = vmul.f32 %v629, %v1445
        %v1467 = vmul.f32 %v630, %v1450
        %v1468 = vpack.c.bf16 %v1453, %v1452
        %v1469 = vpack.c.bf16 %v1455, %v1454
        %v1470 = vpack.c.bf16 %v1457, %v1456
        %v1471 = vpack.c.bf16 %v1459, %v1458
        %v1472 = vpack.c.bf16 %v1461, %v1460
        %v1473 = vpack.c.bf16 %v1463, %v1462
        %v1474 = vpack.c.bf16 %v1465, %v1464
        %v1475 = vpack.c.bf16 %v1467, %v1466
        %v1476 = vld [vmem:[#allocation2] sm:$0xff]
        %v1477 = vld [vmem:[#allocation2 + $0x8] sm:$0xff]
        %1478 = vmatprep.subr.bf16.mxu0 0
        %1479 = vmatpush1.bf16.msra.mxu0 %v1468
        %1480 = vmatprep.subr.bf16.mxu0 0
        %1481 = vmatpush1.bf16.msra.mxu0 %v1469
        %1482 = vmatprep.subr.bf16.mxu0 0
        %1483 = vmatpush1.bf16.msra.mxu0 %v1470
        %1484 = vmatprep.subr.bf16.mxu0 0
        %1485 = vmatpush1.bf16.msra.mxu0 %v1471
        %1486 = vmatprep.subr.bf16.mxu0 0
        %1487 = vmatpush1.bf16.msra.mxu0 %v1472
        %1488 = vmatprep.subr.bf16.mxu0 0
        %1489 = vmatpush1.bf16.msra.mxu0 %v1473
        %1490 = vmatprep.subr.bf16.mxu0 0
        %1491 = vmatpush1.bf16.msra.mxu0 %v1474
        %1492 = vmatprep.subr.bf16.mxu0 0
        %1493 = vmatpush1.bf16.msra.mxu0 %v1475
        %1494 = vmatprep.subr.bf16.mxu0 0
        %1495 = vmatpush1.bf16.msra.mxu0 0
        %1496 = vmatprep.subr.bf16.mxu0 0
        %1497 = vmatpush1.bf16.msra.mxu0 0
        %1498 = vmatprep.subr.bf16.mxu0 0
        %1499 = vmatpush1.bf16.msra.mxu0 0
        %1500 = vmatprep.subr.bf16.mxu0 0
        %1501 = vmatpush1.bf16.msra.mxu0 0
        %1502 = vmatprep.subr.bf16.mxu0 0
        %1503 = vmatpush1.bf16.msra.mxu0 0
        %1504 = vmatprep.subr.bf16.mxu0 0
        %1505 = vmatpush1.bf16.msra.mxu0 0
        %1506 = vmatprep.subr.bf16.mxu0 0
        %1507 = vmatpush1.bf16.msra.mxu0 0
        %1508 = vmatprep.subr.bf16.mxu0 0
        %1509 = vmatpush1.bf16.msra.mxu0 0
        %1510 = vmatprep.mubr.bf16.mxu0 0
        %1511 = vmatmul.mubr.bf16.gmra.mrb[0].mxu0 %v1371
        %v1512 = vpop.f32.mrb[0].mxu0
        %v1513 = vadd.f32 0.0, %v1512
        %v1514 = vpop.f32.mrb[0].mxu0
        %v1515 = vpop.f32.mrb[0].mxu0
        %v1516 = vadd.f32 0.0, %v1515
        %v1517 = vpop.f32.mrb[0].mxu0
        %1518 = vdwg.mxu0
        %v1519 = vadd.f32 %v1476, %v1513
        %v1520 = vadd.f32 %v1477, %v1516
        %1521 = vst [vmem:[#allocation2] sm:$0xff] %v1519
        %1522 = vst [vmem:[#allocation2 + $0x8] sm:$0xff] %v1520
        %v1523 = vlaneseq
        %v1524 = vand.u32 %v1523, 127
        %v1525 = vld [vmem:[%s595] sm:$0xff]
        %v1526 = vld [vmem:[%s595 + $0x8] sm:$0xff]
        %v1527 = vld [vmem:[%s595 + $0x10] sm:$0xff]
        %v1528 = vld [vmem:[%s595 + $0x18] sm:$0xff]
        %v1529 = vld [vmem:[%s595 + $0x20] sm:$0xff]
        %v1530 = vld [vmem:[%s595 + $0x28] sm:$0xff]
        %v1531 = vld [vmem:[%s595 + $0x30] sm:$0xff]
        %v1532 = vld [vmem:[%s595 + $0x38] sm:$0xff]
        %v1533 = vld [vmem:[%s595 + $0x40] sm:$0xff]
        %v1534 = vld [vmem:[%s595 + $0x48] sm:$0xff]
        %v1535 = vld [vmem:[%s595 + $0x50] sm:$0xff]
        %v1536 = vld [vmem:[%s595 + $0x58] sm:$0xff]
        %v1537 = vld [vmem:[%s595 + $0x60] sm:$0xff]
        %v1538 = vld [vmem:[%s595 + $0x68] sm:$0xff]
        %v1539 = vld [vmem:[%s595 + $0x70] sm:$0xff]
        %v1540 = vld [vmem:[%s595 + $0x78] sm:$0xff]
        %v1541 = vld [vmem:[%s589] sm:$0xff]
        %v1542 = vld [vmem:[%s589 + $0x8] sm:$0xff]
        %v1543 = vld [vmem:[%s589 + $0x10] sm:$0xff]
        %v1544 = vld [vmem:[%s589 + $0x18] sm:$0xff]
        %v1545 = vld [vmem:[%s589 + $0x20] sm:$0xff]
        %v1546 = vld [vmem:[%s589 + $0x28] sm:$0xff]
        %v1547 = vld [vmem:[%s589 + $0x30] sm:$0xff]
        %v1548 = vld [vmem:[%s589 + $0x38] sm:$0xff]
        %v1549 = vld [vmem:[%s589 + $0x40] sm:$0xff]
        %v1550 = vld [vmem:[%s589 + $0x48] sm:$0xff]
        %v1551 = vld [vmem:[%s589 + $0x50] sm:$0xff]
        %v1552 = vld [vmem:[%s589 + $0x58] sm:$0xff]
        %v1553 = vld [vmem:[%s589 + $0x60] sm:$0xff]
        %v1554 = vld [vmem:[%s589 + $0x68] sm:$0xff]
        %v1555 = vld [vmem:[%s589 + $0x70] sm:$0xff]
        %v1556 = vld [vmem:[%s589 + $0x78] sm:$0xff]
        %1557 = vset.pattern.permute.xlu0 0
        %1558 = vperm.xlu0 %1557, %v1525
        %v1559 = vpop.permute.xlu0 %1558
        %1560 = vset.pattern.permute.xlu0 0
        %1561 = vperm.xlu0 %1560, %v1526
        %v1562 = vpop.permute.xlu0 %1561
        %1563 = vset.pattern.permute.xlu0 0
        %1564 = vperm.xlu0 %1563, %v1527
        %v1565 = vpop.permute.xlu0 %1564
        %1566 = vset.pattern.permute.xlu0 0
        %1567 = vperm.xlu0 %1566, %v1528
        %v1568 = vpop.permute.xlu0 %1567
        %1569 = vset.pattern.permute.xlu0 0
        %1570 = vperm.xlu0 %1569, %v1529
        %v1571 = vpop.permute.xlu0 %1570
        %1572 = vset.pattern.permute.xlu0 0
        %1573 = vperm.xlu0 %1572, %v1530
        %v1574 = vpop.permute.xlu0 %1573
        %1575 = vset.pattern.permute.xlu0 0
        %1576 = vperm.xlu0 %1575, %v1531
        %v1577 = vpop.permute.xlu0 %1576
        %1578 = vset.pattern.permute.xlu0 0
        %1579 = vperm.xlu0 %1578, %v1532
        %v1580 = vpop.permute.xlu0 %1579
        %1581 = vset.pattern.permute.xlu0 0
        %1582 = vperm.xlu0 %1581, %v1533
        %v1583 = vpop.permute.xlu0 %1582
        %1584 = vset.pattern.permute.xlu0 0
        %1585 = vperm.xlu0 %1584, %v1534
        %v1586 = vpop.permute.xlu0 %1585
        %1587 = vset.pattern.permute.xlu0 0
        %1588 = vperm.xlu0 %1587, %v1535
        %v1589 = vpop.permute.xlu0 %1588
        %1590 = vset.pattern.permute.xlu0 0
        %1591 = vperm.xlu0 %1590, %v1536
        %v1592 = vpop.permute.xlu0 %1591
        %1593 = vset.pattern.permute.xlu0 0
        %1594 = vperm.xlu0 %1593, %v1537
        %v1595 = vpop.permute.xlu0 %1594
        %1596 = vset.pattern.permute.xlu0 0
        %1597 = vperm.xlu0 %1596, %v1538
        %v1598 = vpop.permute.xlu0 %1597
        %1599 = vset.pattern.permute.xlu0 0
        %1600 = vperm.xlu0 %1599, %v1539
        %v1601 = vpop.permute.xlu0 %1600
        %1602 = vset.pattern.permute.xlu0 0
        %1603 = vperm.xlu0 %1602, %v1540
        %v1604 = vpop.permute.xlu0 %1603
        %vm1605 = vcmp.eq.s32.totalorder %v1559, %v1524
        %vm1606 = vcmp.eq.s32.totalorder %v1562, %v1524
        %vm1607 = vcmp.eq.s32.totalorder %v1565, %v1524
        %vm1608 = vcmp.eq.s32.totalorder %v1568, %v1524
        %vm1609 = vcmp.eq.s32.totalorder %v1571, %v1524
        %vm1610 = vcmp.eq.s32.totalorder %v1574, %v1524
        %vm1611 = vcmp.eq.s32.totalorder %v1577, %v1524
        %vm1612 = vcmp.eq.s32.totalorder %v1580, %v1524
        %vm1613 = vcmp.eq.s32.totalorder %v1583, %v1524
        %vm1614 = vcmp.eq.s32.totalorder %v1586, %v1524
        %vm1615 = vcmp.eq.s32.totalorder %v1589, %v1524
        %vm1616 = vcmp.eq.s32.totalorder %v1592, %v1524
        %vm1617 = vcmp.eq.s32.totalorder %v1595, %v1524
        %vm1618 = vcmp.eq.s32.totalorder %v1598, %v1524
        %vm1619 = vcmp.eq.s32.totalorder %v1601, %v1524
        %vm1620 = vcmp.eq.s32.totalorder %v1604, %v1524
        %v1621 = vsel %vm1605, 1, 0
        %v1622 = vsel %vm1606, 1, 0
        %v1623 = vsel %vm1607, 1, 0
        %v1624 = vsel %vm1608, 1, 0
        %v1625 = vsel %vm1609, 1, 0
        %v1626 = vsel %vm1610, 1, 0
        %v1627 = vsel %vm1611, 1, 0
        %v1628 = vsel %vm1612, 1, 0
        %v1629 = vsel %vm1613, 1, 0
        %v1630 = vsel %vm1614, 1, 0
        %v1631 = vsel %vm1615, 1, 0
        %v1632 = vsel %vm1616, 1, 0
        %v1633 = vsel %vm1617, 1, 0
        %v1634 = vsel %vm1618, 1, 0
        %v1635 = vsel %vm1619, 1, 0
        %v1636 = vsel %vm1620, 1, 0
        %v1637 = vcvt.s32.f32 %v1621
        %v1638 = vcvt.s32.f32 %v1622
        %v1639 = vcvt.s32.f32 %v1623
        %v1640 = vcvt.s32.f32 %v1624
        %v1641 = vcvt.s32.f32 %v1625
        %v1642 = vcvt.s32.f32 %v1626
        %v1643 = vcvt.s32.f32 %v1627
        %v1644 = vcvt.s32.f32 %v1628
        %v1645 = vcvt.s32.f32 %v1629
        %v1646 = vcvt.s32.f32 %v1630
        %v1647 = vcvt.s32.f32 %v1631
        %v1648 = vcvt.s32.f32 %v1632
        %v1649 = vcvt.s32.f32 %v1633
        %v1650 = vcvt.s32.f32 %v1634
        %v1651 = vcvt.s32.f32 %v1635
        %v1652 = vcvt.s32.f32 %v1636
        %1653 = vset.pattern.permute.xlu0 0
        %1654 = vperm.xlu0 %1653, %v1541
        %v1655 = vpop.permute.xlu0 %1654
        %1656 = vset.pattern.permute.xlu0 0
        %1657 = vperm.xlu0 %1656, %v1542
        %v1658 = vpop.permute.xlu0 %1657
        %1659 = vset.pattern.permute.xlu0 0
        %1660 = vperm.xlu0 %1659, %v1543
        %v1661 = vpop.permute.xlu0 %1660
        %1662 = vset.pattern.permute.xlu0 0
        %1663 = vperm.xlu0 %1662, %v1544
        %v1664 = vpop.permute.xlu0 %1663
        %1665 = vset.pattern.permute.xlu0 0
        %1666 = vperm.xlu0 %1665, %v1545
        %v1667 = vpop.permute.xlu0 %1666
        %1668 = vset.pattern.permute.xlu0 0
        %1669 = vperm.xlu0 %1668, %v1546
        %v1670 = vpop.permute.xlu0 %1669
        %1671 = vset.pattern.permute.xlu0 0
        %1672 = vperm.xlu0 %1671, %v1547
        %v1673 = vpop.permute.xlu0 %1672
        %1674 = vset.pattern.permute.xlu0 0
        %1675 = vperm.xlu0 %1674, %v1548
        %v1676 = vpop.permute.xlu0 %1675
        %1677 = vset.pattern.permute.xlu0 0
        %1678 = vperm.xlu0 %1677, %v1549
        %v1679 = vpop.permute.xlu0 %1678
        %1680 = vset.pattern.permute.xlu0 0
        %1681 = vperm.xlu0 %1680, %v1550
        %v1682 = vpop.permute.xlu0 %1681
        %1683 = vset.pattern.permute.xlu0 0
        %1684 = vperm.xlu0 %1683, %v1551
        %v1685 = vpop.permute.xlu0 %1684
        %1686 = vset.pattern.permute.xlu0 0
        %1687 = vperm.xlu0 %1686, %v1552
        %v1688 = vpop.permute.xlu0 %1687
        %1689 = vset.pattern.permute.xlu0 0
        %1690 = vperm.xlu0 %1689, %v1553
        %v1691 = vpop.permute.xlu0 %1690
        %1692 = vset.pattern.permute.xlu0 0
        %1693 = vperm.xlu0 %1692, %v1554
        %v1694 = vpop.permute.xlu0 %1693
        %1695 = vset.pattern.permute.xlu0 0
        %1696 = vperm.xlu0 %1695, %v1555
        %v1697 = vpop.permute.xlu0 %1696
        %1698 = vset.pattern.permute.xlu0 0
        %1699 = vperm.xlu0 %1698, %v1556
        %v1700 = vpop.permute.xlu0 %1699
        %vm1701 = vcmp.eq.s32.totalorder %v1655, %v1524
        %vm1702 = vcmp.eq.s32.totalorder %v1658, %v1524
        %vm1703 = vcmp.eq.s32.totalorder %v1661, %v1524
        %vm1704 = vcmp.eq.s32.totalorder %v1664, %v1524
        %vm1705 = vcmp.eq.s32.totalorder %v1667, %v1524
        %vm1706 = vcmp.eq.s32.totalorder %v1670, %v1524
        %vm1707 = vcmp.eq.s32.totalorder %v1673, %v1524
        %vm1708 = vcmp.eq.s32.totalorder %v1676, %v1524
        %vm1709 = vcmp.eq.s32.totalorder %v1679, %v1524
        %vm1710 = vcmp.eq.s32.totalorder %v1682, %v1524
        %vm1711 = vcmp.eq.s32.totalorder %v1685, %v1524
        %vm1712 = vcmp.eq.s32.totalorder %v1688, %v1524
        %vm1713 = vcmp.eq.s32.totalorder %v1691, %v1524
        %vm1714 = vcmp.eq.s32.totalorder %v1694, %v1524
        %vm1715 = vcmp.eq.s32.totalorder %v1697, %v1524
        %vm1716 = vcmp.eq.s32.totalorder %v1700, %v1524
        %v1717 = vsel %vm1701, 1, 0
        %v1718 = vsel %vm1702, 1, 0
        %v1719 = vsel %vm1703, 1, 0
        %v1720 = vsel %vm1704, 1, 0
        %v1721 = vsel %vm1705, 1, 0
        %v1722 = vsel %vm1706, 1, 0
        %v1723 = vsel %vm1707, 1, 0
        %v1724 = vsel %vm1708, 1, 0
        %v1725 = vsel %vm1709, 1, 0
        %v1726 = vsel %vm1710, 1, 0
        %v1727 = vsel %vm1711, 1, 0
        %v1728 = vsel %vm1712, 1, 0
        %v1729 = vsel %vm1713, 1, 0
        %v1730 = vsel %vm1714, 1, 0
        %v1731 = vsel %vm1715, 1, 0
        %v1732 = vsel %vm1716, 1, 0
        %v1733 = vcvt.s32.f32 %v1717
        %v1734 = vcvt.s32.f32 %v1718
        %v1735 = vcvt.s32.f32 %v1719
        %v1736 = vcvt.s32.f32 %v1720
        %v1737 = vcvt.s32.f32 %v1721
        %v1738 = vcvt.s32.f32 %v1722
        %v1739 = vcvt.s32.f32 %v1723
        %v1740 = vcvt.s32.f32 %v1724
        %v1741 = vcvt.s32.f32 %v1725
        %v1742 = vcvt.s32.f32 %v1726
        %v1743 = vcvt.s32.f32 %v1727
        %v1744 = vcvt.s32.f32 %v1728
        %v1745 = vcvt.s32.f32 %v1729
        %v1746 = vcvt.s32.f32 %v1730
        %v1747 = vcvt.s32.f32 %v1731
        %v1748 = vcvt.s32.f32 %v1732
        %v1749 = vsub.f32 %v1637, %v1733
        %v1750 = vsub.f32 %v1638, %v1734
        %v1751 = vsub.f32 %v1639, %v1735
        %v1752 = vsub.f32 %v1640, %v1736
        %v1753 = vsub.f32 %v1641, %v1737
        %v1754 = vsub.f32 %v1642, %v1738
        %v1755 = vsub.f32 %v1643, %v1739
        %v1756 = vsub.f32 %v1644, %v1740
        %v1757 = vsub.f32 %v1645, %v1741
        %v1758 = vsub.f32 %v1646, %v1742
        %v1759 = vsub.f32 %v1647, %v1743
        %v1760 = vsub.f32 %v1648, %v1744
        %v1761 = vsub.f32 %v1649, %v1745
        %v1762 = vsub.f32 %v1650, %v1746
        %v1763 = vsub.f32 %v1651, %v1747
        %v1764 = vsub.f32 %v1652, %v1748
        %v1765 = vpack.c.bf16 %v1750, %v1749
        %v1766 = vpack.c.bf16 %v1752, %v1751
        %v1767 = vpack.c.bf16 %v1754, %v1753
        %v1768 = vpack.c.bf16 %v1756, %v1755
        %v1769 = vpack.c.bf16 %v1758, %v1757
        %v1770 = vpack.c.bf16 %v1760, %v1759
        %v1771 = vpack.c.bf16 %v1762, %v1761
        %v1772 = vpack.c.bf16 %v1764, %v1763
        %v1773 = vld [vmem:[%s1] sm:$0xff]
        %v1774 = vld [vmem:[%s1 + $0x8] sm:$0xff]
        %v1775 = vpack.c.bf16 %v1774, %v1773
        %vm1776 = vcmask 130048
        %v1778 = vsel %vm1776, %v1765, 0
        %v1781 = vsel %vm1776, %v1766, 0
        %v1784 = vsel %vm1776, %v1767, 0
        %v1787 = vsel %vm1776, %v1768, 0
        %v1790 = vsel %vm1776, %v1769, 0
        %v1793 = vsel %vm1776, %v1770, 0
        %v1796 = vsel %vm1776, %v1771, 0
        %v1799 = vsel %vm1776, %v1772, 0
        %1801 = vmatprep.subr.bf16.mxu0 0
        %1802 = vmatpush1.bf16.msra.mxu0 %v1775
        %1803 = vmatprep.subr.bf16.mxu0 0
        %1804 = vmatpush1.bf16.msra.mxu0 0
        %1805 = vmatprep.subr.bf16.mxu0 0
        %1806 = vmatpush1.bf16.msra.mxu0 0
        %1807 = vmatprep.subr.bf16.mxu0 0
        %1808 = vmatpush1.bf16.msra.mxu0 0
        %1809 = vmatprep.subr.bf16.mxu0 0
        %1810 = vmatpush1.bf16.msra.mxu0 0
        %1811 = vmatprep.subr.bf16.mxu0 0
        %1812 = vmatpush1.bf16.msra.mxu0 0
        %1813 = vmatprep.subr.bf16.mxu0 0
        %1814 = vmatpush1.bf16.msra.mxu0 0
        %1815 = vmatprep.subr.bf16.mxu0 0
        %1816 = vmatpush1.bf16.msra.mxu0 0
        %1817 = vmatprep.subr.bf16.mxu0 0
        %1818 = vmatpush1.bf16.msra.mxu0 0
        %1819 = vmatprep.subr.bf16.mxu0 0
        %1820 = vmatpush1.bf16.msra.mxu0 0
        %1821 = vmatprep.subr.bf16.mxu0 0
        %1822 = vmatpush1.bf16.msra.mxu0 0
        %1823 = vmatprep.subr.bf16.mxu0 0
        %1824 = vmatpush1.bf16.msra.mxu0 0
        %1825 = vmatprep.subr.bf16.mxu0 0
        %1826 = vmatpush1.bf16.msra.mxu0 0
        %1827 = vmatprep.subr.bf16.mxu0 0
        %1828 = vmatpush1.bf16.msra.mxu0 0
        %1829 = vmatprep.subr.bf16.mxu0 0
        %1830 = vmatpush1.bf16.msra.mxu0 0
        %1831 = vmatprep.subr.bf16.mxu0 0
        %1832 = vmatpush1.bf16.msra.mxu0 0
        %1833 = vmatprep.mubr.bf16.mxu0 0
        %1834 = vmatmul.mubr.bf16.gmra.mrb[0].mxu0 %v1778
        %v1835 = vpop.f32.mrb[0].mxu0
        %v1836 = vadd.f32 0.0, %v1835
        %v1837 = vpop.f32.mrb[0].mxu0
        %v1838 = vpop.f32.mrb[0].mxu0
        %v1839 = vadd.f32 0.0, %v1838
        %v1840 = vpop.f32.mrb[0].mxu0
        %1841 = vmatprep.mubr.bf16.mxu0 0
        %1842 = vmatmul.mubr.bf16.gmra.mrb[0].mxu0 %v1781
        %v1843 = vpop.f32.mrb[0].mxu0
        %v1844 = vadd.f32 0.0, %v1843
        %v1845 = vpop.f32.mrb[0].mxu0
        %v1846 = vpop.f32.mrb[0].mxu0
        %v1847 = vadd.f32 0.0, %v1846
        %v1848 = vpop.f32.mrb[0].mxu0
        %1849 = vmatprep.mubr.bf16.mxu0 0
        %1850 = vmatmul.mubr.bf16.gmra.mrb[0].mxu0 %v1784
        %v1851 = vpop.f32.mrb[0].mxu0
        %v1852 = vadd.f32 0.0, %v1851
        %v1853 = vpop.f32.mrb[0].mxu0
        %v1854 = vpop.f32.mrb[0].mxu0
        %v1855 = vadd.f32 0.0, %v1854
        %v1856 = vpop.f32.mrb[0].mxu0
        %1857 = vmatprep.mubr.bf16.mxu0 0
        %1858 = vmatmul.mubr.bf16.gmra.mrb[0].mxu0 %v1787
        %v1859 = vpop.f32.mrb[0].mxu0
        %v1860 = vadd.f32 0.0, %v1859
        %v1861 = vpop.f32.mrb[0].mxu0
        %v1862 = vpop.f32.mrb[0].mxu0
        %v1863 = vadd.f32 0.0, %v1862
        %v1864 = vpop.f32.mrb[0].mxu0
        %1865 = vmatprep.mubr.bf16.mxu0 0
        %1866 = vmatmul.mubr.bf16.gmra.mrb[0].mxu0 %v1790
        %v1867 = vpop.f32.mrb[0].mxu0
        %v1868 = vadd.f32 0.0, %v1867
        %v1869 = vpop.f32.mrb[0].mxu0
        %v1870 = vpop.f32.mrb[0].mxu0
        %v1871 = vadd.f32 0.0, %v1870
        %v1872 = vpop.f32.mrb[0].mxu0
        %1873 = vmatprep.mubr.bf16.mxu0 0
        %1874 = vmatmul.mubr.bf16.gmra.mrb[0].mxu0 %v1793
        %v1875 = vpop.f32.mrb[0].mxu0
        %v1876 = vadd.f32 0.0, %v1875
        %v1877 = vpop.f32.mrb[0].mxu0
        %v1878 = vpop.f32.mrb[0].mxu0
        %v1879 = vadd.f32 0.0, %v1878
        %v1880 = vpop.f32.mrb[0].mxu0
        %1881 = vmatprep.mubr.bf16.mxu0 0
        %1882 = vmatmul.mubr.bf16.gmra.mrb[0].mxu0 %v1796
        %v1883 = vpop.f32.mrb[0].mxu0
        %v1884 = vadd.f32 0.0, %v1883
        %v1885 = vpop.f32.mrb[0].mxu0
        %v1886 = vpop.f32.mrb[0].mxu0
        %v1887 = vadd.f32 0.0, %v1886
        %v1888 = vpop.f32.mrb[0].mxu0
        %1889 = vmatprep.mubr.bf16.mxu0 0
        %1890 = vmatmul.mubr.bf16.gmra.mrb[0].mxu0 %v1799
        %v1891 = vpop.f32.mrb[0].mxu0
        %v1892 = vadd.f32 0.0, %v1891
        %v1893 = vpop.f32.mrb[0].mxu0
        %v1894 = vpop.f32.mrb[0].mxu0
        %v1895 = vadd.f32 0.0, %v1894
        %v1896 = vpop.f32.mrb[0].mxu0
        %1897 = vdwg.mxu0
        %v1898 = vmul.f32 %v1836, %v1836
        %v1899 = vmul.f32 %v1839, %v1839
        %v1900 = vmul.f32 %v1844, %v1844
        %v1901 = vmul.f32 %v1847, %v1847
        %v1902 = vmul.f32 %v1852, %v1852
        %v1903 = vmul.f32 %v1855, %v1855
        %v1904 = vmul.f32 %v1860, %v1860
        %v1905 = vmul.f32 %v1863, %v1863
        %v1906 = vmul.f32 %v1868, %v1868
        %v1907 = vmul.f32 %v1871, %v1871
        %v1908 = vmul.f32 %v1876, %v1876
        %v1909 = vmul.f32 %v1879, %v1879
        %v1910 = vmul.f32 %v1884, %v1884
        %v1911 = vmul.f32 %v1887, %v1887
        %v1912 = vmul.f32 %v1892, %v1892
        %v1913 = vmul.f32 %v1895, %v1895
        %1914 = vadd.xlane.f32.xlu0 %v1898
        %v1915 = vpop.xlane.xlu0 %1914
        %1916 = vadd.xlane.f32.xlu0 %v1899
        %v1917 = vpop.xlane.xlu0 %1916
        %1918 = vadd.xlane.f32.xlu0 %v1900
        %v1919 = vpop.xlane.xlu0 %1918
        %1920 = vadd.xlane.f32.xlu0 %v1901
        %v1921 = vpop.xlane.xlu0 %1920
        %1922 = vadd.xlane.f32.xlu0 %v1902
        %v1923 = vpop.xlane.xlu0 %1922
        %1924 = vadd.xlane.f32.xlu0 %v1903
        %v1925 = vpop.xlane.xlu0 %1924
        %1926 = vadd.xlane.f32.xlu0 %v1904
        %v1927 = vpop.xlane.xlu0 %1926
        %1928 = vadd.xlane.f32.xlu0 %v1905
        %v1929 = vpop.xlane.xlu0 %1928
        %1930 = vadd.xlane.f32.xlu0 %v1906
        %v1931 = vpop.xlane.xlu0 %1930
        %1932 = vadd.xlane.f32.xlu0 %v1907
        %v1933 = vpop.xlane.xlu0 %1932
        %1934 = vadd.xlane.f32.xlu0 %v1908
        %v1935 = vpop.xlane.xlu0 %1934
        %1936 = vadd.xlane.f32.xlu0 %v1909
        %v1937 = vpop.xlane.xlu0 %1936
        %1938 = vadd.xlane.f32.xlu0 %v1910
        %v1939 = vpop.xlane.xlu0 %1938
        %1940 = vadd.xlane.f32.xlu0 %v1911
        %v1941 = vpop.xlane.xlu0 %1940
        %1942 = vadd.xlane.f32.xlu0 %v1912
        %v1943 = vpop.xlane.xlu0 %1942
        %1944 = vadd.xlane.f32.xlu0 %v1913
        %v1945 = vpop.xlane.xlu0 %1944
        %v1946 = vrsqrt.pop %v1915
        %v1947 = vmul.f32 %v1915, %v1946
        %vm1948 = vcmp.eq.f32.partialorder %v1915, inf
        %v1949 = vsel %vm1948, %v1915, %v1947
        %vm1950 = vcmp.eq.f32.partialorder %v1915, 0.0
        %v1951 = vand.u32 %v1915, 2147483648
        %v1952 = vsel %vm1950, %v1951, %v1949
        %v1953 = vrsqrt.pop %v1917
        %v1954 = vmul.f32 %v1917, %v1953
        %vm1955 = vcmp.eq.f32.partialorder %v1917, inf
        %v1956 = vsel %vm1955, %v1917, %v1954
        %vm1957 = vcmp.eq.f32.partialorder %v1917, 0.0
        %v1958 = vand.u32 %v1917, 2147483648
        %v1959 = vsel %vm1957, %v1958, %v1956
        %v1960 = vrsqrt.pop %v1919
        %v1961 = vmul.f32 %v1919, %v1960
        %vm1962 = vcmp.eq.f32.partialorder %v1919, inf
        %v1963 = vsel %vm1962, %v1919, %v1961
        %vm1964 = vcmp.eq.f32.partialorder %v1919, 0.0
        %v1965 = vand.u32 %v1919, 2147483648
        %v1966 = vsel %vm1964, %v1965, %v1963
        %v1967 = vrsqrt.pop %v1921
        %v1968 = vmul.f32 %v1921, %v1967
        %vm1969 = vcmp.eq.f32.partialorder %v1921, inf
        %v1970 = vsel %vm1969, %v1921, %v1968
        %vm1971 = vcmp.eq.f32.partialorder %v1921, 0.0
        %v1972 = vand.u32 %v1921, 2147483648
        %v1973 = vsel %vm1971, %v1972, %v1970
        %v1974 = vrsqrt.pop %v1923
        %v1975 = vmul.f32 %v1923, %v1974
        %vm1976 = vcmp.eq.f32.partialorder %v1923, inf
        %v1977 = vsel %vm1976, %v1923, %v1975
        %vm1978 = vcmp.eq.f32.partialorder %v1923, 0.0
        %v1979 = vand.u32 %v1923, 2147483648
        %v1980 = vsel %vm1978, %v1979, %v1977
        %v1981 = vrsqrt.pop %v1925
        %v1982 = vmul.f32 %v1925, %v1981
        %vm1983 = vcmp.eq.f32.partialorder %v1925, inf
        %v1984 = vsel %vm1983, %v1925, %v1982
        %vm1985 = vcmp.eq.f32.partialorder %v1925, 0.0
        %v1986 = vand.u32 %v1925, 2147483648
        %v1987 = vsel %vm1985, %v1986, %v1984
        %v1988 = vrsqrt.pop %v1927
        %v1989 = vmul.f32 %v1927, %v1988
        %vm1990 = vcmp.eq.f32.partialorder %v1927, inf
        %v1991 = vsel %vm1990, %v1927, %v1989
        %vm1992 = vcmp.eq.f32.partialorder %v1927, 0.0
        %v1993 = vand.u32 %v1927, 2147483648
        %v1994 = vsel %vm1992, %v1993, %v1991
        %v1995 = vrsqrt.pop %v1929
        %v1996 = vmul.f32 %v1929, %v1995
        %vm1997 = vcmp.eq.f32.partialorder %v1929, inf
        %v1998 = vsel %vm1997, %v1929, %v1996
        %vm1999 = vcmp.eq.f32.partialorder %v1929, 0.0
        %v2000 = vand.u32 %v1929, 2147483648
        %v2001 = vsel %vm1999, %v2000, %v1998
        %v2002 = vrsqrt.pop %v1931
        %v2003 = vmul.f32 %v1931, %v2002
        %vm2004 = vcmp.eq.f32.partialorder %v1931, inf
        %v2005 = vsel %vm2004, %v1931, %v2003
        %vm2006 = vcmp.eq.f32.partialorder %v1931, 0.0
        %v2007 = vand.u32 %v1931, 2147483648
        %v2008 = vsel %vm2006, %v2007, %v2005
        %v2009 = vrsqrt.pop %v1933
        %v2010 = vmul.f32 %v1933, %v2009
        %vm2011 = vcmp.eq.f32.partialorder %v1933, inf
        %v2012 = vsel %vm2011, %v1933, %v2010
        %vm2013 = vcmp.eq.f32.partialorder %v1933, 0.0
        %v2014 = vand.u32 %v1933, 2147483648
        %v2015 = vsel %vm2013, %v2014, %v2012
        %v2016 = vrsqrt.pop %v1935
        %v2017 = vmul.f32 %v1935, %v2016
        %vm2018 = vcmp.eq.f32.partialorder %v1935, inf
        %v2019 = vsel %vm2018, %v1935, %v2017
        %vm2020 = vcmp.eq.f32.partialorder %v1935, 0.0
        %v2021 = vand.u32 %v1935, 2147483648
        %v2022 = vsel %vm2020, %v2021, %v2019
        %v2023 = vrsqrt.pop %v1937
        %v2024 = vmul.f32 %v1937, %v2023
        %vm2025 = vcmp.eq.f32.partialorder %v1937, inf
        %v2026 = vsel %vm2025, %v1937, %v2024
        %vm2027 = vcmp.eq.f32.partialorder %v1937, 0.0
        %v2028 = vand.u32 %v1937, 2147483648
        %v2029 = vsel %vm2027, %v2028, %v2026
        %v2030 = vrsqrt.pop %v1939
        %v2031 = vmul.f32 %v1939, %v2030
        %vm2032 = vcmp.eq.f32.partialorder %v1939, inf
        %v2033 = vsel %vm2032, %v1939, %v2031
        %vm2034 = vcmp.eq.f32.partialorder %v1939, 0.0
        %v2035 = vand.u32 %v1939, 2147483648
        %v2036 = vsel %vm2034, %v2035, %v2033
        %v2037 = vrsqrt.pop %v1941
        %v2038 = vmul.f32 %v1941, %v2037
        %vm2039 = vcmp.eq.f32.partialorder %v1941, inf
        %v2040 = vsel %vm2039, %v1941, %v2038
        %vm2041 = vcmp.eq.f32.partialorder %v1941, 0.0
        %v2042 = vand.u32 %v1941, 2147483648
        %v2043 = vsel %vm2041, %v2042, %v2040
        %v2044 = vrsqrt.pop %v1943
        %v2045 = vmul.f32 %v1943, %v2044
        %vm2046 = vcmp.eq.f32.partialorder %v1943, inf
        %v2047 = vsel %vm2046, %v1943, %v2045
        %vm2048 = vcmp.eq.f32.partialorder %v1943, 0.0
        %v2049 = vand.u32 %v1943, 2147483648
        %v2050 = vsel %vm2048, %v2049, %v2047
        %v2051 = vrsqrt.pop %v1945
        %v2052 = vmul.f32 %v1945, %v2051
        %vm2053 = vcmp.eq.f32.partialorder %v1945, inf
        %v2054 = vsel %vm2053, %v1945, %v2052
        %vm2055 = vcmp.eq.f32.partialorder %v1945, 0.0
        %v2056 = vand.u32 %v1945, 2147483648
        %v2057 = vsel %vm2055, %v2056, %v2054
        %v2058 = vadd.f32 %v1952, 1.0
        %v2059 = vadd.f32 %v1959, 1.0
        %v2060 = vadd.f32 %v1966, 1.0
        %v2061 = vadd.f32 %v1973, 1.0
        %v2062 = vadd.f32 %v1980, 1.0
        %v2063 = vadd.f32 %v1987, 1.0
        %v2064 = vadd.f32 %v1994, 1.0
        %v2065 = vadd.f32 %v2001, 1.0
        %v2066 = vadd.f32 %v2008, 1.0
        %v2067 = vadd.f32 %v2015, 1.0
        %v2068 = vadd.f32 %v2022, 1.0
        %v2069 = vadd.f32 %v2029, 1.0
        %v2070 = vadd.f32 %v2036, 1.0
        %v2071 = vadd.f32 %v2043, 1.0
        %v2072 = vadd.f32 %v2050, 1.0
        %v2073 = vadd.f32 %v2057, 1.0
        %v2074 = vrcp.pop %v2058
        %v2075 = vmul.f32 %v1166, %v2074
        %v2076 = vrcp.pop %v2059
        %v2077 = vmul.f32 %v1171, %v2076
        %v2078 = vrcp.pop %v2060
        %v2079 = vmul.f32 %v1176, %v2078
        %v2080 = vrcp.pop %v2061
        %v2081 = vmul.f32 %v1181, %v2080
        %v2082 = vrcp.pop %v2062
        %v2083 = vmul.f32 %v1186, %v2082
        %v2084 = vrcp.pop %v2063
        %v2085 = vmul.f32 %v1191, %v2084
        %v2086 = vrcp.pop %v2064
        %v2087 = vmul.f32 %v1196, %v2086
        %v2088 = vrcp.pop %v2065
        %v2089 = vmul.f32 %v1201, %v2088
        %v2090 = vrcp.pop %v2066
        %v2091 = vmul.f32 %v1206, %v2090
        %v2092 = vrcp.pop %v2067
        %v2093 = vmul.f32 %v1211, %v2092
        %v2094 = vrcp.pop %v2068
        %v2095 = vmul.f32 %v1216, %v2094
        %v2096 = vrcp.pop %v2069
        %v2097 = vmul.f32 %v1221, %v2096
        %v2098 = vrcp.pop %v2070
        %v2099 = vmul.f32 %v1226, %v2098
        %v2100 = vrcp.pop %v2071
        %v2101 = vmul.f32 %v1231, %v2100
        %v2102 = vrcp.pop %v2072
        %v2103 = vmul.f32 %v1236, %v2102
        %v2104 = vrcp.pop %v2073
        %v2105 = vmul.f32 %v1241, %v2104
        %2107 = vset.pattern.permute.xlu0 1
        %2108 = vperm.xlu0 %2107, %v2075
        %v2109 = vpop.permute.xlu0 %2108
        %2112 = vset.pattern.permute.xlu0 1
        %2113 = vperm.xlu0 %2112, %v2077
        %v2114 = vpop.permute.xlu0 %2113
        %2117 = vset.pattern.permute.xlu0 1
        %2118 = vperm.xlu0 %2117, %v2079
        %v2119 = vpop.permute.xlu0 %2118
        %2122 = vset.pattern.permute.xlu0 1
        %2123 = vperm.xlu0 %2122, %v2081
        %v2124 = vpop.permute.xlu0 %2123
        %2127 = vset.pattern.permute.xlu0 1
        %2128 = vperm.xlu0 %2127, %v2083
        %v2129 = vpop.permute.xlu0 %2128
        %2132 = vset.pattern.permute.xlu0 1
        %2133 = vperm.xlu0 %2132, %v2085
        %v2134 = vpop.permute.xlu0 %2133
        %2137 = vset.pattern.permute.xlu0 1
        %2138 = vperm.xlu0 %2137, %v2087
        %v2139 = vpop.permute.xlu0 %2138
        %2142 = vset.pattern.permute.xlu0 1
        %2143 = vperm.xlu0 %2142, %v2089
        %v2144 = vpop.permute.xlu0 %2143
        %2147 = vset.pattern.permute.xlu0 1
        %2148 = vperm.xlu0 %2147, %v2091
        %v2149 = vpop.permute.xlu0 %2148
        %2152 = vset.pattern.permute.xlu0 1
        %2153 = vperm.xlu0 %2152, %v2093
        %v2154 = vpop.permute.xlu0 %2153
        %2157 = vset.pattern.permute.xlu0 1
        %2158 = vperm.xlu0 %2157, %v2095
        %v2159 = vpop.permute.xlu0 %2158
        %2162 = vset.pattern.permute.xlu0 1
        %2163 = vperm.xlu0 %2162, %v2097
        %v2164 = vpop.permute.xlu0 %2163
        %2167 = vset.pattern.permute.xlu0 1
        %2168 = vperm.xlu0 %2167, %v2099
        %v2169 = vpop.permute.xlu0 %2168
        %2172 = vset.pattern.permute.xlu0 1
        %2173 = vperm.xlu0 %2172, %v2101
        %v2174 = vpop.permute.xlu0 %2173
        %2177 = vset.pattern.permute.xlu0 1
        %2178 = vperm.xlu0 %2177, %v2103
        %v2179 = vpop.permute.xlu0 %2178
        %2182 = vset.pattern.permute.xlu0 1
        %2183 = vperm.xlu0 %2182, %v2105
        %v2184 = vpop.permute.xlu0 %2183
        %v2186 = vmul.f32 %v1836, %v2109
        %v2187 = vmul.f32 %v1839, %v2114
        %v2188 = vmul.f32 %v1844, %v2119
        %v2189 = vmul.f32 %v1847, %v2124
        %v2190 = vmul.f32 %v1852, %v2129
        %v2191 = vmul.f32 %v1855, %v2134
        %v2192 = vmul.f32 %v1860, %v2139
        %v2193 = vmul.f32 %v1863, %v2144
        %v2194 = vmul.f32 %v1868, %v2149
        %v2195 = vmul.f32 %v1871, %v2154
        %v2196 = vmul.f32 %v1876, %v2159
        %v2197 = vmul.f32 %v1879, %v2164
        %v2198 = vmul.f32 %v1884, %v2169
        %v2199 = vmul.f32 %v1887, %v2174
        %v2200 = vmul.f32 %v1892, %v2179
        %v2201 = vmul.f32 %v1895, %v2184
        %v2202 = vpack.c.bf16 %v2187, %v2186
        %v2203 = vpack.c.bf16 %v2189, %v2188
        %v2204 = vpack.c.bf16 %v2191, %v2190
        %v2205 = vpack.c.bf16 %v2193, %v2192
        %v2206 = vpack.c.bf16 %v2195, %v2194
        %v2207 = vpack.c.bf16 %v2197, %v2196
        %v2208 = vpack.c.bf16 %v2199, %v2198
        %v2209 = vpack.c.bf16 %v2201, %v2200
        %v2210 = vld [vmem:[#allocation3] sm:$0xff]
        %v2211 = vld [vmem:[#allocation3 + $0x8] sm:$0xff]
        %2212 = vmatprep.subr.bf16.mxu0 0
        %2213 = vmatpush1.bf16.msra.mxu0 %v2202
        %2214 = vmatprep.subr.bf16.mxu0 0
        %2215 = vmatpush1.bf16.msra.mxu0 %v2203
        %2216 = vmatprep.subr.bf16.mxu0 0
        %2217 = vmatpush1.bf16.msra.mxu0 %v2204
        %2218 = vmatprep.subr.bf16.mxu0 0
        %2219 = vmatpush1.bf16.msra.mxu0 %v2205
        %2220 = vmatprep.subr.bf16.mxu0 0
        %2221 = vmatpush1.bf16.msra.mxu0 %v2206
        %2222 = vmatprep.subr.bf16.mxu0 0
        %2223 = vmatpush1.bf16.msra.mxu0 %v2207
        %2224 = vmatprep.subr.bf16.mxu0 0
        %2225 = vmatpush1.bf16.msra.mxu0 %v2208
        %2226 = vmatprep.subr.bf16.mxu0 0
        %2227 = vmatpush1.bf16.msra.mxu0 %v2209
        %2228 = vmatprep.subr.bf16.mxu0 0
        %2229 = vmatpush1.bf16.msra.mxu0 0
        %2230 = vmatprep.subr.bf16.mxu0 0
        %2231 = vmatpush1.bf16.msra.mxu0 0
        %2232 = vmatprep.subr.bf16.mxu0 0
        %2233 = vmatpush1.bf16.msra.mxu0 0
        %2234 = vmatprep.subr.bf16.mxu0 0
        %2235 = vmatpush1.bf16.msra.mxu0 0
        %2236 = vmatprep.subr.bf16.mxu0 0
        %2237 = vmatpush1.bf16.msra.mxu0 0
        %2238 = vmatprep.subr.bf16.mxu0 0
        %2239 = vmatpush1.bf16.msra.mxu0 0
        %2240 = vmatprep.subr.bf16.mxu0 0
        %2241 = vmatpush1.bf16.msra.mxu0 0
        %2242 = vmatprep.subr.bf16.mxu0 0
        %2243 = vmatpush1.bf16.msra.mxu0 0
        %2244 = vmatprep.mubr.bf16.mxu0 0
        %2245 = vmatmul.mubr.bf16.gmra.mrb[0].mxu0 %v1371
        %v2246 = vpop.f32.mrb[0].mxu0
        %v2247 = vadd.f32 0.0, %v2246
        %v2248 = vpop.f32.mrb[0].mxu0
        %v2249 = vpop.f32.mrb[0].mxu0
        %v2250 = vadd.f32 0.0, %v2249
        %v2251 = vpop.f32.mrb[0].mxu0
        %2252 = vdwg.mxu0
        %v2253 = vadd.f32 %v2210, %v2247
        %v2254 = vadd.f32 %v2211, %v2250
        %2255 = vst [vmem:[#allocation3] sm:$0xff] %v2253
        %2256 = vst [vmem:[#allocation3 + $0x8] sm:$0xff] %v2254
        %p2257 = scmp.eq.s32.totalorder %s30, 2
        // Predicated region
        $region85: #{_node_operation_impl.1} parent=79 // pred_check
          %p2258 = pneg %p2257
        $region86: #{_node_operation_impl.1} parent=79 // pred_check_branch
          %2260 = sbr.rel (%p2258) target = $region88
        $region87: #{_node_operation_impl.1} parent=79 // pred_region
          %v2261 = vld [vmem:[%s0] sm:$0xff]
          %v2262 = vld [vmem:[%s0 + $0x8] sm:$0xff]
          %v2263 = vld [vmem:[%s10] sm:$0xff]
          %v2264 = vld [vmem:[%s10 + $0x8] sm:$0xff]
          %v2265 = vld [vmem:[%s10 + $0x10] sm:$0xff]
          %v2266 = vld [vmem:[%s10 + $0x18] sm:$0xff]
          %v2267 = vld [vmem:[%s10 + $0x20] sm:$0xff]
          %v2268 = vld [vmem:[%s10 + $0x28] sm:$0xff]
          %v2269 = vld [vmem:[%s10 + $0x30] sm:$0xff]
          %v2270 = vld [vmem:[%s10 + $0x38] sm:$0xff]
          %v2271 = vld [vmem:[%s10 + $0x40] sm:$0xff]
          %v2272 = vld [vmem:[%s10 + $0x48] sm:$0xff]
          %v2273 = vld [vmem:[%s10 + $0x50] sm:$0xff]
          %v2274 = vld [vmem:[%s10 + $0x58] sm:$0xff]
          %v2275 = vld [vmem:[%s10 + $0x60] sm:$0xff]
          %v2276 = vld [vmem:[%s10 + $0x68] sm:$0xff]
          %v2277 = vld [vmem:[%s10 + $0x70] sm:$0xff]
          %v2278 = vld [vmem:[%s10 + $0x78] sm:$0xff]
          %v2279 = vld [vmem:[#allocation2] sm:$0xff]
          %v2280 = vld [vmem:[#allocation2 + $0x8] sm:$0xff]
          %v2281 = vld [vmem:[%s11] sm:$0xff]
          %v2282 = vld [vmem:[%s11 + $0x8] sm:$0xff]
          %v2283 = vld [vmem:[%s11 + $0x10] sm:$0xff]
          %v2284 = vld [vmem:[%s11 + $0x18] sm:$0xff]
          %v2285 = vld [vmem:[%s11 + $0x20] sm:$0xff]
          %v2286 = vld [vmem:[%s11 + $0x28] sm:$0xff]
          %v2287 = vld [vmem:[%s11 + $0x30] sm:$0xff]
          %v2288 = vld [vmem:[%s11 + $0x38] sm:$0xff]
          %v2289 = vld [vmem:[%s11 + $0x40] sm:$0xff]
          %v2290 = vld [vmem:[%s11 + $0x48] sm:$0xff]
          %v2291 = vld [vmem:[%s11 + $0x50] sm:$0xff]
          %v2292 = vld [vmem:[%s11 + $0x58] sm:$0xff]
          %v2293 = vld [vmem:[%s11 + $0x60] sm:$0xff]
          %v2294 = vld [vmem:[%s11 + $0x68] sm:$0xff]
          %v2295 = vld [vmem:[%s11 + $0x70] sm:$0xff]
          %v2296 = vld [vmem:[%s11 + $0x78] sm:$0xff]
          %2297 = vmatprep.subr.mxu0 0.0
          %2298 = vmatpush1.msra.mxu0 %v2281
          %2299 = vmatprep.subr.mxu0 0.0
          %2300 = vmatpush1.msra.mxu0 %v2282
          %2301 = vmatprep.subr.mxu0 0.0
          %2302 = vmatpush1.msra.mxu0 %v2283
          %2303 = vmatprep.subr.mxu0 0.0
          %2304 = vmatpush1.msra.mxu0 %v2284
          %2305 = vmatprep.subr.mxu0 0.0
          %2306 = vmatpush1.msra.mxu0 %v2285
          %2307 = vmatprep.subr.mxu0 0.0
          %2308 = vmatpush1.msra.mxu0 %v2286
          %2309 = vmatprep.subr.mxu0 0.0
          %2310 = vmatpush1.msra.mxu0 %v2287
          %2311 = vmatprep.subr.mxu0 0.0
          %2312 = vmatpush1.msra.mxu0 %v2288
          %2313 = vmatprep.subr.mxu0 0.0
          %2314 = vmatpush1.msra.mxu0 %v2289
          %2315 = vmatprep.subr.mxu0 0.0
          %2316 = vmatpush1.msra.mxu0 %v2290
          %2317 = vmatprep.subr.mxu0 0.0
          %2318 = vmatpush1.msra.mxu0 %v2291
          %2319 = vmatprep.subr.mxu0 0.0
          %2320 = vmatpush1.msra.mxu0 %v2292
          %2321 = vmatprep.subr.mxu0 0.0
          %2322 = vmatpush1.msra.mxu0 %v2293
          %2323 = vmatprep.subr.mxu0 0.0
          %2324 = vmatpush1.msra.mxu0 %v2294
          %2325 = vmatprep.subr.mxu0 0.0
          %2326 = vmatpush1.msra.mxu0 %v2295
          %2327 = vmatprep.subr.mxu0 0.0
          %2328 = vmatpush1.msra.mxu0 %v2296
          %2329 = vmatprep.subr.mxu0 0.0
          %2330 = vmatpush1.msra.mxu0 0.0
          %2331 = vmatprep.subr.mxu0 0.0
          %2332 = vmatpush1.msra.mxu0 0.0
          %2333 = vmatprep.subr.mxu0 0.0
          %2334 = vmatpush1.msra.mxu0 0.0
          %2335 = vmatprep.subr.mxu0 0.0
          %2336 = vmatpush1.msra.mxu0 0.0
          %2337 = vmatprep.subr.mxu0 0.0
          %2338 = vmatpush1.msra.mxu0 0.0
          %2339 = vmatprep.subr.mxu0 0.0
          %2340 = vmatpush1.msra.mxu0 0.0
          %2341 = vmatprep.subr.mxu0 0.0
          %2342 = vmatpush1.msra.mxu0 0.0
          %2343 = vmatprep.subr.mxu0 0.0
          %2344 = vmatpush1.msra.mxu0 0.0
          %2345 = vmatprep.subr.mxu0 0.0
          %2346 = vmatpush1.msra.mxu0 0.0
          %2347 = vmatprep.subr.mxu0 0.0
          %2348 = vmatpush1.msra.mxu0 0.0
          %2349 = vmatprep.subr.mxu0 0.0
          %2350 = vmatpush1.msra.mxu0 0.0
          %2351 = vmatprep.subr.mxu0 0.0
          %2352 = vmatpush1.msra.mxu0 0.0
          %2353 = vmatprep.subr.mxu0 0.0
          %2354 = vmatpush1.msra.mxu0 0.0
          %2355 = vmatprep.subr.mxu0 0.0
          %2356 = vmatpush1.msra.mxu0 0.0
          %2357 = vmatprep.subr.mxu0 0.0
          %2358 = vmatpush1.msra.mxu0 0.0
          %2359 = vmatprep.subr.mxu0 0.0
          %2360 = vmatpush1.msra.mxu0 0.0
          %2361 = vmatprep.mubr.f32.mxu0 0.0
          %2362 = vmatmul.mubr.f32.gmra.mrb[0].mxu0 %v2279
          %v2363 = vpop.f32.mrb[0].mxu0
          %v2364 = vadd.f32 0.0, %v2363
          %v2365 = vpop.f32.mrb[0].mxu0
          %2366 = vmatprep.mubr.f32.mxu0 0.0
          %2367 = vmatmul.mubr.f32.gmra.mrb[0].mxu0 %v2280
          %v2368 = vpop.f32.mrb[0].mxu0
          %v2369 = vadd.f32 0.0, %v2368
          %v2370 = vpop.f32.mrb[0].mxu0
          %2371 = vdwg.mxu0
          %2372 = vmatprep.subr.mxu0 0.0
          %2373 = vmatpush1.msra.mxu0 %v2263
          %2374 = vmatprep.subr.mxu0 0.0
          %2375 = vmatpush1.msra.mxu0 %v2264
          %2376 = vmatprep.subr.mxu0 0.0
          %2377 = vmatpush1.msra.mxu0 %v2265
          %2378 = vmatprep.subr.mxu0 0.0
          %2379 = vmatpush1.msra.mxu0 %v2266
          %2380 = vmatprep.subr.mxu0 0.0
          %2381 = vmatpush1.msra.mxu0 %v2267
          %2382 = vmatprep.subr.mxu0 0.0
          %2383 = vmatpush1.msra.mxu0 %v2268
          %2384 = vmatprep.subr.mxu0 0.0
          %2385 = vmatpush1.msra.mxu0 %v2269
          %2386 = vmatprep.subr.mxu0 0.0
          %2387 = vmatpush1.msra.mxu0 %v2270
          %2388 = vmatprep.subr.mxu0 0.0
          %2389 = vmatpush1.msra.mxu0 %v2271
          %2390 = vmatprep.subr.mxu0 0.0
          %2391 = vmatpush1.msra.mxu0 %v2272
          %2392 = vmatprep.subr.mxu0 0.0
          %2393 = vmatpush1.msra.mxu0 %v2273
          %2394 = vmatprep.subr.mxu0 0.0
          %2395 = vmatpush1.msra.mxu0 %v2274
          %2396 = vmatprep.subr.mxu0 0.0
          %2397 = vmatpush1.msra.mxu0 %v2275
          %2398 = vmatprep.subr.mxu0 0.0
          %2399 = vmatpush1.msra.mxu0 %v2276
          %2400 = vmatprep.subr.mxu0 0.0
          %2401 = vmatpush1.msra.mxu0 %v2277
          %2402 = vmatprep.subr.mxu0 0.0
          %2403 = vmatpush1.msra.mxu0 %v2278
          %2404 = vmatprep.subr.mxu0 0.0
          %2405 = vmatpush1.msra.mxu0 0.0
          %2406 = vmatprep.subr.mxu0 0.0
          %2407 = vmatpush1.msra.mxu0 0.0
          %2408 = vmatprep.subr.mxu0 0.0
          %2409 = vmatpush1.msra.mxu0 0.0
          %2410 = vmatprep.subr.mxu0 0.0
          %2411 = vmatpush1.msra.mxu0 0.0
          %2412 = vmatprep.subr.mxu0 0.0
          %2413 = vmatpush1.msra.mxu0 0.0
          %2414 = vmatprep.subr.mxu0 0.0
          %2415 = vmatpush1.msra.mxu0 0.0
          %2416 = vmatprep.subr.mxu0 0.0
          %2417 = vmatpush1.msra.mxu0 0.0
          %2418 = vmatprep.subr.mxu0 0.0
          %2419 = vmatpush1.msra.mxu0 0.0
          %2420 = vmatprep.subr.mxu0 0.0
          %2421 = vmatpush1.msra.mxu0 0.0
          %2422 = vmatprep.subr.mxu0 0.0
          %2423 = vmatpush1.msra.mxu0 0.0
          %2424 = vmatprep.subr.mxu0 0.0
          %2425 = vmatpush1.msra.mxu0 0.0
          %2426 = vmatprep.subr.mxu0 0.0
          %2427 = vmatpush1.msra.mxu0 0.0
          %2428 = vmatprep.subr.mxu0 0.0
          %2429 = vmatpush1.msra.mxu0 0.0
          %2430 = vmatprep.subr.mxu0 0.0
          %2431 = vmatpush1.msra.mxu0 0.0
          %2432 = vmatprep.subr.mxu0 0.0
          %2433 = vmatpush1.msra.mxu0 0.0
          %2434 = vmatprep.subr.mxu0 0.0
          %2435 = vmatpush1.msra.mxu0 0.0
          %2436 = vmatprep.mubr.f32.mxu0 0.0
          %2437 = vmatmul.mubr.f32.gmra.mrb[0].mxu0 %v2261
          %v2438 = vpop.f32.mrb[0].mxu0
          %v2439 = vadd.f32 %v2364, %v2438
          %v2440 = vpop.f32.mrb[0].mxu0
          %2441 = vmatprep.mubr.f32.mxu0 0.0
          %2442 = vmatmul.mubr.f32.gmra.mrb[0].mxu0 %v2262
          %v2443 = vpop.f32.mrb[0].mxu0
          %v2444 = vadd.f32 %v2369, %v2443
          %v2445 = vpop.f32.mrb[0].mxu0
          %2446 = vdwg.mxu0
          %v2447 = vld [vmem:[%s12] sm:$0x1]
          %v2449 = vlaneseq
          %v2450 = vshrl.u32 %v2449, 7
          %v2451 = vsub.s32 0, %v2450
          %v2452 = vrot.slane %v2447, %v2451
          %v2454 = vadd.f32 %v2439, %v2452
          %v2455 = vadd.f32 %v2444, %v2452
          %v2456 = vxor.u32 %v2454, 2147483648
          %v2457 = vxor.u32 %v2455, 2147483648
          %v2458 = vmul.f32 %v2456, 1.442695
          %v2459 = vpow.pop %v2458
          %v2460 = vmul.f32 %v2457, 1.442695
          %v2461 = vpow.pop %v2460
          %v2462 = vadd.f32 %v2459, 1.0
          %v2463 = vadd.f32 %v2461, 1.0
          %v2464 = vrcp.pop %v2462
          %v2465 = vmul.f32 1.0, %v2464
          %v2466 = vrcp.pop %v2463
          %v2467 = vmul.f32 1.0, %v2466
          %v2468 = vmul.f32 %v2454, %v2465
          %v2469 = vmul.f32 %v2455, %v2467
          %v2470 = vld [vmem:[%s13] sm:$0xff]
          %v2471 = vld [vmem:[%s13 + $0x8] sm:$0xff]
          %v2472 = vld [vmem:[%s13 + $0x10] sm:$0xff]
          %v2473 = vld [vmem:[%s13 + $0x18] sm:$0xff]
          %v2474 = vld [vmem:[%s13 + $0x20] sm:$0xff]
          %v2475 = vld [vmem:[%s13 + $0x28] sm:$0xff]
          %v2476 = vld [vmem:[%s13 + $0x30] sm:$0xff]
          %v2477 = vld [vmem:[%s13 + $0x38] sm:$0xff]
          %v2478 = vld [vmem:[%s13 + $0x40] sm:$0xff]
          %v2479 = vld [vmem:[%s13 + $0x48] sm:$0xff]
          %v2480 = vld [vmem:[%s13 + $0x50] sm:$0xff]
          %v2481 = vld [vmem:[%s13 + $0x58] sm:$0xff]
          %v2482 = vld [vmem:[%s13 + $0x60] sm:$0xff]
          %v2483 = vld [vmem:[%s13 + $0x68] sm:$0xff]
          %v2484 = vld [vmem:[%s13 + $0x70] sm:$0xff]
          %v2485 = vld [vmem:[%s13 + $0x78] sm:$0xff]
          %v2486 = vld [vmem:[%s14] sm:$0x1]
          %v2488 = vlaneseq
          %v2489 = vshrl.u32 %v2488, 7
          %v2490 = vsub.s32 0, %v2489
          %v2491 = vrot.slane %v2486, %v2490
          %2493 = vmatprep.subr.mxu0 0.0
          %2494 = vmatpush1.msra.mxu0 %v2470
          %2495 = vmatprep.subr.mxu0 0.0
          %2496 = vmatpush1.msra.mxu0 %v2471
          %2497 = vmatprep.subr.mxu0 0.0
          %2498 = vmatpush1.msra.mxu0 %v2472
          %2499 = vmatprep.subr.mxu0 0.0
          %2500 = vmatpush1.msra.mxu0 %v2473
          %2501 = vmatprep.subr.mxu0 0.0
          %2502 = vmatpush1.msra.mxu0 %v2474
          %2503 = vmatprep.subr.mxu0 0.0
          %2504 = vmatpush1.msra.mxu0 %v2475
          %2505 = vmatprep.subr.mxu0 0.0
          %2506 = vmatpush1.msra.mxu0 %v2476
          %2507 = vmatprep.subr.mxu0 0.0
          %2508 = vmatpush1.msra.mxu0 %v2477
          %2509 = vmatprep.subr.mxu0 0.0
          %2510 = vmatpush1.msra.mxu0 %v2478
          %2511 = vmatprep.subr.mxu0 0.0
          %2512 = vmatpush1.msra.mxu0 %v2479
          %2513 = vmatprep.subr.mxu0 0.0
          %2514 = vmatpush1.msra.mxu0 %v2480
          %2515 = vmatprep.subr.mxu0 0.0
          %2516 = vmatpush1.msra.mxu0 %v2481
          %2517 = vmatprep.subr.mxu0 0.0
          %2518 = vmatpush1.msra.mxu0 %v2482
          %2519 = vmatprep.subr.mxu0 0.0
          %2520 = vmatpush1.msra.mxu0 %v2483
          %2521 = vmatprep.subr.mxu0 0.0
          %2522 = vmatpush1.msra.mxu0 %v2484
          %2523 = vmatprep.subr.mxu0 0.0
          %2524 = vmatpush1.msra.mxu0 %v2485
          %2525 = vmatprep.subr.mxu0 0.0
          %2526 = vmatpush1.msra.mxu0 0.0
          %2527 = vmatprep.subr.mxu0 0.0
          %2528 = vmatpush1.msra.mxu0 0.0
          %2529 = vmatprep.subr.mxu0 0.0
          %2530 = vmatpush1.msra.mxu0 0.0
          %2531 = vmatprep.subr.mxu0 0.0
          %2532 = vmatpush1.msra.mxu0 0.0
          %2533 = vmatprep.subr.mxu0 0.0
          %2534 = vmatpush1.msra.mxu0 0.0
          %2535 = vmatprep.subr.mxu0 0.0
          %2536 = vmatpush1.msra.mxu0 0.0
          %2537 = vmatprep.subr.mxu0 0.0
          %2538 = vmatpush1.msra.mxu0 0.0
          %2539 = vmatprep.subr.mxu0 0.0
          %2540 = vmatpush1.msra.mxu0 0.0
          %2541 = vmatprep.subr.mxu0 0.0
          %2542 = vmatpush1.msra.mxu0 0.0
          %2543 = vmatprep.subr.mxu0 0.0
          %2544 = vmatpush1.msra.mxu0 0.0
          %2545 = vmatprep.subr.mxu0 0.0
          %2546 = vmatpush1.msra.mxu0 0.0
          %2547 = vmatprep.subr.mxu0 0.0
          %2548 = vmatpush1.msra.mxu0 0.0
          %2549 = vmatprep.subr.mxu0 0.0
          %2550 = vmatpush1.msra.mxu0 0.0
          %2551 = vmatprep.subr.mxu0 0.0
          %2552 = vmatpush1.msra.mxu0 0.0
          %2553 = vmatprep.subr.mxu0 0.0
          %2554 = vmatpush1.msra.mxu0 0.0
          %2555 = vmatprep.subr.mxu0 0.0
          %2556 = vmatpush1.msra.mxu0 0.0
          %2557 = vmatprep.mubr.f32.mxu0 0.0
          %2558 = vmatmul.mubr.f32.gmra.mrb[0].mxu0 %v2468
          %v2559 = vpop.f32.mrb[0].mxu0
          %v2560 = vadd.f32 %v2491, %v2559
          %v2561 = vpop.f32.mrb[0].mxu0
          %2562 = vmatprep.mubr.f32.mxu0 0.0
          %2563 = vmatmul.mubr.f32.gmra.mrb[0].mxu0 %v2469
          %v2564 = vpop.f32.mrb[0].mxu0
          %v2565 = vadd.f32 %v2491, %v2564
          %v2566 = vpop.f32.mrb[0].mxu0
          %2567 = vdwg.mxu0
          %v2568 = vadd.f32 %v2560, %v2261
          %v2569 = vadd.f32 %v2565, %v2262
          %2570 = vst [vmem:[#allocation4] sm:$0xff] %v2568
          %2571 = vst [vmem:[#allocation4 + $0x8] sm:$0xff] %v2569
          %v2572 = vld [vmem:[%s1] sm:$0xff]
          %v2573 = vld [vmem:[%s1 + $0x8] sm:$0xff]
          %v2574 = vld [vmem:[#allocation3] sm:$0xff]
          %v2575 = vld [vmem:[#allocation3 + $0x8] sm:$0xff]
          %v2576 = vadd.f32 %v2572, %v2574
          %v2577 = vadd.f32 %v2573, %v2575
          %2578 = vst [vmem:[%s16] sm:$0xff] %v2576
          %2579 = vst [vmem:[%s16 + $0x8] sm:$0xff] %v2577
        $region88: #{_node_operation_impl.1} parent=79 // pred_fallthru
          _
        %s2580 = smul.u32 16, %s30
        %p2581 = scmp.lt.s32.totalorder %s2580, 47
        %s2582 = scalar_select %p2581, %s2580, 47
        %s2583 = smul.addr %s2582, 8
        %s2584 = scalar_lea.vmem %s17, %s2583
        // Predicated region
        $region89: #{_node_operation_impl.1} parent=79 // pred_check
          %p2585 = pneg %p378
        $region90: #{_node_operation_impl.1} parent=79 // pred_check_branch
          %2587 = sbr.rel (%p2585) target = $region92
        $region91: #{_node_operation_impl.1} parent=79 // pred_region
          %s2589 = ssub.s32 256, 256
          %2590 = vsyncadd [#allocation5], %s2589
          %s2591 = sshll.u32 [#allocation4], 4
          %s2592 = int_to_ptr.vmem [resolvable:$true] %s2591
          %2597 = dma.vmem_to_hbm [thread:$0]  %s2592, 256, %s15, [#allocation5], 128, 128, 8
        $region92: #{_node_operation_impl.1} parent=79 // pred_fallthru
          _
        // Predicated region
        $region93: #{_node_operation_impl.1} parent=79 // pred_check
          %p2598 = pneg %p399
        $region94: #{_node_operation_impl.1} parent=79 // pred_check_branch
          %2600 = sbr.rel (%p2598) target = $region96
        $region95: #{_node_operation_impl.1} parent=79 // pred_region
          _
        $region96: #{_node_operation_impl.1} parent=79 // pred_fallthru
          _
        // Predicated region
        $region97: #{_node_operation_impl.1} parent=79 // pred_check
          %p2601 = pneg %p425
        $region98: #{_node_operation_impl.1} parent=79 // pred_check_branch
          %2603 = sbr.rel (%p2601) target = $region100
        $region99: #{_node_operation_impl.1} parent=79 // pred_region
          %s2604 = smul.u32 16, %s30
        $region100: #{_node_operation_impl.1} parent=79 // pred_fallthru
          _
        // Predicated region
        $region101: #{_node_operation_impl.1} parent=79 // pred_check
          %p2605 = pneg %p378
        $region102: #{_node_operation_impl.1} parent=79 // pred_check_branch
          %2607 = sbr.rel (%p2605) target = $region104
        $region103: #{_node_operation_impl.1} parent=79 // pred_region
          %2608 = dma.done [#allocation5], 256
        $region104: #{_node_operation_impl.1} parent=79 // pred_fallthru
          _
        // Predicated region
        $region105: #{_node_operation_impl.1} parent=79 // pred_check
          %p2609 = pneg %p399
        $region106: #{_node_operation_impl.1} parent=79 // pred_check_branch
          %2611 = sbr.rel (%p2609) target = $region108
        $region107: #{_node_operation_impl.1} parent=79 // pred_region
          _
        $region108: #{_node_operation_impl.1} parent=79 // pred_fallthru
          _
      $region80: #{_node_operation_impl.1} parent=5 // pred_fallthru
        _
      %p2612 = scmp.le.s32.totalorder 2, %s25
      // Predicated region
      $region109: #{_node_operation_impl.1} parent=5 // pred_check
        %p2613 = pneg %p2612
      $region110: #{_node_operation_impl.1} parent=5 // pred_check_branch
        %2615 = sbr.rel (%p2613) target = $region112
      $region111: #{_node_operation_impl.1} parent=5 // pred_region
        %s2616 = ssub.s32 %s25, 2
        // Predicated region
        $region113: #{_node_operation_impl.1} parent=111 // pred_check
          %p2617 = pneg %p431
        $region114: #{_node_operation_impl.1} parent=111 // pred_check_branch
          %2619 = sbr.rel (%p2617) target = $region116
        $region115: #{_node_operation_impl.1} parent=111 // pred_region
          %s2620 = smul.u32 16, %s31
          %p2621 = scmp.lt.s32.totalorder %s2620, 47
          %s2622 = scalar_select %p2621, %s2620, 47
          %s2623 = smul.addr %s2622, 8
          %s2624 = scalar_lea.vmem %s17, %s2623
        $region116: #{_node_operation_impl.1} parent=111 // pred_fallthru
          _
      $region112: #{_node_operation_impl.1} parent=5 // pred_fallthru
        _
    $region6: #{_node_operation_impl.1} parent=1 // loop_footer
      %s29 = sadd.s32 1, %s25
    $region7: #{_node_operation_impl.1} parent=1 // loop_footer_branch
      %24 = sbr.rel target = $region3
    $region8: #{_node_operation_impl.1} parent=1 // loop_exit
      _
    %2625 = vsyncpa [#allocation5], 1
    %s2626 = scalar_lea.sflag [#allocation5], 1
    %2627 = vsyncpa %s2626, 1

</llo_original>
